<compile_context>
chip_gen: v7x
topology: tpu7x:2x2x1
jax: 0.10.0
libtpu: 0.0.40
codegen_flags: <defaults>
</compile_context>

<pallas_src>
import jax
import jax.numpy as jnp
from jax import lax
from jax.experimental import pallas as pl
from jax.experimental.pallas import tpu as pltpu

# ---- geometry implied by the module (16x16 RGB input, two 4x4 VALID convs) ---
KH = KW = 4
C0, C1, C2 = 3, 10, 8                 # input / conv1-out / conv2-out channels
H = W = 16
HW = H * W                            # 256 flat spatial positions per image
K1 = KH * KW * C0                     # 48  (conv1 im2col depth)
K2 = KH * KW * C1                     # 160 (conv2 im2col depth)
FC1, FC2, FC3 = 256, 64, 2            # fc layer widths
FC3_OFF = 264                         # 8-aligned row offset of fc3 block in fc23 pack
FC23_ROWS = FC3_OFF + FC2 + 8         # 336 rows (fc3 weights + bias row, padded)

VMEM = pltpu.MemorySpace.VMEM


# ------------------------------ fused kernel ---------------------------------

def _net_kernel(x_ref, conv_ref, fc1_ref, fc23_ref, out_ref):
    # x_ref:    (N, C0, 256)   NCHW input with spatial flattened (free reshape)
    # conv_ref: (18, 161)      rows 0..9 : [W1 (10,48) | b1 col]  (im2col layout)
    #                          rows 10..17: [W2 (8,160) | b2 col]
    # fc1_ref:  (9, 256)       rows 0..7 = fc1 weight (in,out), row 8 = bias
    # fc23_ref: (336, 64)      rows 0..255 fc2 W, row 256 fc2 b,
    #                          rows 264..327 fc3 W (cols 0..1), row 328 fc3 b
    n = x_ref.shape[0]
    L = n * HW

    def shift_left(a, k):
        # y[:, p] = a[:, p + k]; zero fill at the tail (those lanes are never
        # consumed by any valid conv/pool output position).
        if k == 0:
            return a
        pad = jnp.zeros((a.shape[0], k), a.dtype)
        return jnp.concatenate([a[:, k:], pad], axis=1)

    # Flat image slab: channels in sublanes, both images side by side in lanes.
    xs = jnp.concatenate([x_ref[i] for i in range(n)], axis=1)        # (3, L)

    # ---------------- conv1 + bias + ReLU: ONE im2col MXU matmul --------------
    w1 = conv_ref[0:C1, 0:K1]                                         # (10, 48)
    b1 = conv_ref[0:C1, K1:K1 + 1]                                    # (10, 1)
    p1 = jnp.concatenate(
        [shift_left(xs, kh * W + kw) for kh in range(KH) for kw in range(KW)],
        axis=0)                                                       # (48, L)
    r1 = jnp.maximum(
        jnp.dot(w1, p1, preferred_element_type=jnp.float32) + b1, 0.0)  # (10, L)
    # r1[:, p] is valid for p = h*16 + w with h, w <= 12 (others garbage).

    # ---------------- 2x2 max pool (floor mode) via lane shifts ---------------
    t1 = jnp.maximum(r1, shift_left(r1, 1))
    m1 = jnp.maximum(t1, shift_left(t1, W))      # pooled cell (i,j) at lane 32i+2j

    # ---------------- conv2 + bias + ReLU: ONE im2col MXU matmul --------------
    w2 = conv_ref[C1:C1 + C2, 0:K2]                                   # (8, 160)
    b2 = conv_ref[C1:C1 + C2, K2:K2 + 1]                              # (8, 1)
    p2 = jnp.concatenate(
        [shift_left(m1, 2 * (kh * W + kw)) for kh in range(KH) for kw in range(KW)],
        axis=0)                                                       # (160, L)
    r2 = jnp.maximum(
        jnp.dot(w2, p2, preferred_element_type=jnp.float32) + b2, 0.0)  # (8, L)
    # conv2 output (r,c) for image i sits at lane i*256 + 32r + 2c.

    # ------ 2x2 max pool + AdaptiveAvgPool2d(1) twice (1x1 map == identity) ---
    t2 = jnp.maximum(r2, shift_left(r2, 2))
    m2 = jnp.maximum(t2, shift_left(t2, 2 * W))  # image i feature at lane i*256

    featT = jnp.concatenate([m2[:, i * HW:i * HW + 1] for i in range(n)], axis=1)
    feat = featT.T                                                    # (n, 8)

    # ---------------- MLP: fc1+ReLU -> fc2+ReLU -> fc3 ------------------------
    h = jnp.maximum(
        jnp.dot(feat, fc1_ref[0:C2, :], preferred_element_type=jnp.float32)
        + fc1_ref[C2:C2 + 1, :], 0.0)                                 # (n, 256)
    h = jnp.maximum(
        jnp.dot(h, fc23_ref[0:FC1, :], preferred_element_type=jnp.float32)
        + fc23_ref[FC1:FC1 + 1, :], 0.0)                              # (n, 64)
    o = (jnp.dot(h, fc23_ref[FC3_OFF:FC3_OFF + FC2, 0:FC3],
                 preferred_element_type=jnp.float32)
         + fc23_ref[FC3_OFF + FC2:FC3_OFF + FC2 + 1, 0:FC3])          # (n, 2)
    out_ref[...] = o.astype(out_ref.dtype)


# -------------------------------- wrapper -------------------------------------

def _vmem_spec():
    return pl.BlockSpec(memory_space=VMEM)


@jax.jit
def net_forward(x_nchw, conv_pack, fc1_pack, fc23_pack):
    n = x_nchw.shape[0]
    # NCHW consumed directly: flattening (H,W) is a free reshape, no transpose.
    x = x_nchw.reshape(n, C0, HW).astype(jnp.float32)
    return pl.pallas_call(
        _net_kernel,
        out_shape=jax.ShapeDtypeStruct((n, FC3), jnp.float32),
        in_specs=[_vmem_spec()] * 4,
        out_specs=_vmem_spec(),
    )(x, conv_pack, fc1_pack, fc23_pack)


def pack_params(params):
    """Pack the 11 parameter tensors into 3 arrays (done once, outside jit)."""
    w1m = params["conv1_w"].reshape(K1, C1).T            # (10, 48): cols (kh,kw,ci)
    w2m = params["conv2_w"].reshape(K2, C2).T            # (8, 160)
    conv = jnp.zeros((C1 + C2, K2 + 1), jnp.float32)
    conv = conv.at[0:C1, 0:K1].set(w1m)
    conv = conv.at[0:C1, K1].set(params["conv1_b"])
    conv = conv.at[C1:C1 + C2, 0:K2].set(w2m)
    conv = conv.at[C1:C1 + C2, K2].set(params["conv2_b"])

    fc1 = jnp.concatenate([params["fc1_w"], params["fc1_b"][None, :]], axis=0)

    fc23 = jnp.zeros((FC23_ROWS, FC2), jnp.float32)
    fc23 = fc23.at[0:FC1, :].set(params["fc2_w"])
    fc23 = fc23.at[FC1, :].set(params["fc2_b"])
    fc23 = fc23.at[FC3_OFF:FC3_OFF + FC2, 0:FC3].set(params["fc3_w"])
    fc23 = fc23.at[FC3_OFF + FC2, 0:FC3].set(params["fc3_b"])
    return conv, fc1, fc23


# --------------------------- pure-JAX reference -------------------------------

def reference_forward(x_nchw, params):
    x = jnp.transpose(x_nchw, (0, 2, 3, 1)).astype(jnp.float32)

    def conv(y, w, b):
        z = lax.conv_general_dilated(
            y, w, (1, 1), "VALID",
            dimension_numbers=("NHWC", "HWIO", "NHWC"),
            precision=lax.Precision.HIGHEST)
        return jax.nn.relu(z + b.reshape(1, 1, 1, -1))

    def maxpool(y):
        return lax.reduce_window(y, -jnp.inf, lax.max,
                                 (1, 2, 2, 1), (1, 2, 2, 1), "VALID")

    y = maxpool(conv(x, params["conv1_w"], params["conv1_b"]))
    y = maxpool(conv(y, params["conv2_w"], params["conv2_b"]))
    y = jnp.mean(y, axis=(1, 2))      # AdaptiveAvgPool2d(1) twice + squeeze
    hp = lax.Precision.HIGHEST
    h = jax.nn.relu(jnp.dot(y, params["fc1_w"], precision=hp) + params["fc1_b"])
    h = jax.nn.relu(jnp.dot(h, params["fc2_w"], precision=hp) + params["fc2_b"])
    return jnp.dot(h, params["fc3_w"], precision=hp) + params["fc3_b"]


# ---------------------------------- main ---------------------------------------

if __name__ == "__main__":
    key = jax.random.PRNGKey(0)
    keys = jax.random.split(key, 11)

    def u(k, shape, fan_in):
        bound = 1.0 / float(fan_in) ** 0.5
        return jax.random.uniform(k, shape, jnp.float32, -bound, bound)

    # deterministic synthetic parameters (shapes implied by Net.__init__)
    params = {
        "conv1_w": u(keys[0], (KH, KW, C0, C1), KH * KW * C0),   # HWIO
        "conv1_b": u(keys[1], (C1,), KH * KW * C0),
        "conv2_w": u(keys[2], (KH, KW, C1, C2), KH * KW * C1),
        "conv2_b": u(keys[3], (C2,), KH * KW * C1),
        "fc1_w":   u(keys[4], (C2, FC1), C2),
        "fc1_b":   u(keys[5], (FC1,), C2),
        "fc2_w":   u(keys[6], (FC1, FC2), FC1),
        "fc2_b":   u(keys[7], (FC2,), FC1),
        "fc3_w":   u(keys[8], (FC2, FC3), FC2),
        "fc3_b":   u(keys[9], (FC3,), FC2),
    }

    # batch=2 so torch.squeeze keeps the batch dim -> output (2, 2)
    x = jax.random.normal(keys[10], (2, C0, H, W), jnp.float32)   # NCHW like torch

    conv_pack, fc1_pack, fc23_pack = pack_params(params)

    out = jax.block_until_ready(net_forward(x, conv_pack, fc1_pack, fc23_pack))
    ref = jax.block_until_ready(reference_forward(x, params))

    assert out.shape == (2, FC3), out.shape
    if not jnp.allclose(out, ref, atol=1e-3, rtol=1e-3):
        err = float(jnp.max(jnp.abs(out - ref)))
        raise AssertionError(
            f"Pallas/reference mismatch (max abs err {err}):\n{out}\nvs\n{ref}")
    print("KERNEL_OK")
</pallas_src>

<mosaic_0001>
module attributes {stable_mosaic.version = 11 : i64} {
  func.func @_net_kernel(%arg0: memref<2x3x256xf32, #tpu.memory_space<vmem>>, %arg1: memref<18x161xf32, #tpu.memory_space<vmem>>, %arg2: memref<9x256xf32, #tpu.memory_space<vmem>>, %arg3: memref<336x64xf32, #tpu.memory_space<vmem>>, %arg4: memref<2x2xf32, #tpu.memory_space<vmem>>) attributes {dimension_semantics = [], scalar_prefetch = 0 : i64, scratch_operands = 0 : i64, tpu.core_type = #tpu.core_type<tc>} {
    %c0 = arith.constant 0 : index
    %c0_0 = arith.constant 0 : index
    %c0_1 = arith.constant 0 : index
    %0 = vector.load %arg0[%c0, %c0_0, %c0_1] : memref<2x3x256xf32, #tpu.memory_space<vmem>>, vector<1x3x256xf32>
    %1 = vector.shape_cast %0 : vector<1x3x256xf32> to vector<3x256xf32>
    %c1 = arith.constant 1 : index
    %c0_2 = arith.constant 0 : index
    %c0_3 = arith.constant 0 : index
    %2 = vector.load %arg0[%c1, %c0_2, %c0_3] : memref<2x3x256xf32, #tpu.memory_space<vmem>>, vector<1x3x256xf32>
    %3 = vector.shape_cast %2 : vector<1x3x256xf32> to vector<3x256xf32>
    %4 = tpu.concatenate %1, %3 in 1 : vector<3x256xf32>, vector<3x256xf32> -> vector<3x512xf32>
    %c0_4 = arith.constant 0 : index
    %c0_5 = arith.constant 0 : index
    %5 = vector.load %arg1[%c0_4, %c0_5] : memref<18x161xf32, #tpu.memory_space<vmem>>, vector<10x48xf32>
    %c0_6 = arith.constant 0 : index
    %c48 = arith.constant 48 : index
    %6 = vector.load %arg1[%c0_6, %c48] : memref<18x161xf32, #tpu.memory_space<vmem>>, vector<10x1xf32>
    %cst = arith.constant 0.000000e+00 : f32
    %7 = vector.broadcast %cst : f32 to vector<3x1xf32>
    %8 = vector.extract_strided_slice %4 {offsets = [0, 1], sizes = [3, 511], strides = [1, 1]} : vector<3x512xf32> to vector<3x511xf32>
    %9 = tpu.concatenate %8, %7 in 1 : vector<3x511xf32>, vector<3x1xf32> -> vector<3x512xf32>
    %cst_7 = arith.constant 0.000000e+00 : f32
    %10 = vector.broadcast %cst_7 : f32 to vector<3x2xf32>
    %11 = vector.extract_strided_slice %4 {offsets = [0, 2], sizes = [3, 510], strides = [1, 1]} : vector<3x512xf32> to vector<3x510xf32>
    %12 = tpu.concatenate %11, %10 in 1 : vector<3x510xf32>, vector<3x2xf32> -> vector<3x512xf32>
    %cst_8 = arith.constant 0.000000e+00 : f32
    %13 = vector.broadcast %cst_8 : f32 to vector<3x3xf32>
    %14 = vector.extract_strided_slice %4 {offsets = [0, 3], sizes = [3, 509], strides = [1, 1]} : vector<3x512xf32> to vector<3x509xf32>
    %15 = tpu.concatenate %14, %13 in 1 : vector<3x509xf32>, vector<3x3xf32> -> vector<3x512xf32>
    %cst_9 = arith.constant 0.000000e+00 : f32
    %16 = vector.broadcast %cst_9 : f32 to vector<3x16xf32>
    %17 = vector.extract_strided_slice %4 {offsets = [0, 16], sizes = [3, 496], strides = [1, 1]} : vector<3x512xf32> to vector<3x496xf32>
    %18 = tpu.concatenate %17, %16 in 1 : vector<3x496xf32>, vector<3x16xf32> -> vector<3x512xf32>
    %cst_10 = arith.constant 0.000000e+00 : f32
    %19 = vector.broadcast %cst_10 : f32 to vector<3x17xf32>
    %20 = vector.extract_strided_slice %4 {offsets = [0, 17], sizes = [3, 495], strides = [1, 1]} : vector<3x512xf32> to vector<3x495xf32>
    %21 = tpu.concatenate %20, %19 in 1 : vector<3x495xf32>, vector<3x17xf32> -> vector<3x512xf32>
    %cst_11 = arith.constant 0.000000e+00 : f32
    %22 = vector.broadcast %cst_11 : f32 to vector<3x18xf32>
    %23 = vector.extract_strided_slice %4 {offsets = [0, 18], sizes = [3, 494], strides = [1, 1]} : vector<3x512xf32> to vector<3x494xf32>
    %24 = tpu.concatenate %23, %22 in 1 : vector<3x494xf32>, vector<3x18xf32> -> vector<3x512xf32>
    %cst_12 = arith.constant 0.000000e+00 : f32
    %25 = vector.broadcast %cst_12 : f32 to vector<3x19xf32>
    %26 = vector.extract_strided_slice %4 {offsets = [0, 19], sizes = [3, 493], strides = [1, 1]} : vector<3x512xf32> to vector<3x493xf32>
    %27 = tpu.concatenate %26, %25 in 1 : vector<3x493xf32>, vector<3x19xf32> -> vector<3x512xf32>
    %cst_13 = arith.constant 0.000000e+00 : f32
    %28 = vector.broadcast %cst_13 : f32 to vector<3x32xf32>
    %29 = vector.extract_strided_slice %4 {offsets = [0, 32], sizes = [3, 480], strides = [1, 1]} : vector<3x512xf32> to vector<3x480xf32>
    %30 = tpu.concatenate %29, %28 in 1 : vector<3x480xf32>, vector<3x32xf32> -> vector<3x512xf32>
    %cst_14 = arith.constant 0.000000e+00 : f32
    %31 = vector.broadcast %cst_14 : f32 to vector<3x33xf32>
    %32 = vector.extract_strided_slice %4 {offsets = [0, 33], sizes = [3, 479], strides = [1, 1]} : vector<3x512xf32> to vector<3x479xf32>
    %33 = tpu.concatenate %32, %31 in 1 : vector<3x479xf32>, vector<3x33xf32> -> vector<3x512xf32>
    %cst_15 = arith.constant 0.000000e+00 : f32
    %34 = vector.broadcast %cst_15 : f32 to vector<3x34xf32>
    %35 = vector.extract_strided_slice %4 {offsets = [0, 34], sizes = [3, 478], strides = [1, 1]} : vector<3x512xf32> to vector<3x478xf32>
    %36 = tpu.concatenate %35, %34 in 1 : vector<3x478xf32>, vector<3x34xf32> -> vector<3x512xf32>
    %cst_16 = arith.constant 0.000000e+00 : f32
    %37 = vector.broadcast %cst_16 : f32 to vector<3x35xf32>
    %38 = vector.extract_strided_slice %4 {offsets = [0, 35], sizes = [3, 477], strides = [1, 1]} : vector<3x512xf32> to vector<3x477xf32>
    %39 = tpu.concatenate %38, %37 in 1 : vector<3x477xf32>, vector<3x35xf32> -> vector<3x512xf32>
    %cst_17 = arith.constant 0.000000e+00 : f32
    %40 = vector.broadcast %cst_17 : f32 to vector<3x48xf32>
    %41 = vector.extract_strided_slice %4 {offsets = [0, 48], sizes = [3, 464], strides = [1, 1]} : vector<3x512xf32> to vector<3x464xf32>
    %42 = tpu.concatenate %41, %40 in 1 : vector<3x464xf32>, vector<3x48xf32> -> vector<3x512xf32>
    %cst_18 = arith.constant 0.000000e+00 : f32
    %43 = vector.broadcast %cst_18 : f32 to vector<3x49xf32>
    %44 = vector.extract_strided_slice %4 {offsets = [0, 49], sizes = [3, 463], strides = [1, 1]} : vector<3x512xf32> to vector<3x463xf32>
    %45 = tpu.concatenate %44, %43 in 1 : vector<3x463xf32>, vector<3x49xf32> -> vector<3x512xf32>
    %cst_19 = arith.constant 0.000000e+00 : f32
    %46 = vector.broadcast %cst_19 : f32 to vector<3x50xf32>
    %47 = vector.extract_strided_slice %4 {offsets = [0, 50], sizes = [3, 462], strides = [1, 1]} : vector<3x512xf32> to vector<3x462xf32>
    %48 = tpu.concatenate %47, %46 in 1 : vector<3x462xf32>, vector<3x50xf32> -> vector<3x512xf32>
    %cst_20 = arith.constant 0.000000e+00 : f32
    %49 = vector.broadcast %cst_20 : f32 to vector<3x51xf32>
    %50 = vector.extract_strided_slice %4 {offsets = [0, 51], sizes = [3, 461], strides = [1, 1]} : vector<3x512xf32> to vector<3x461xf32>
    %51 = tpu.concatenate %50, %49 in 1 : vector<3x461xf32>, vector<3x51xf32> -> vector<3x512xf32>
    %52 = tpu.concatenate %4, %9, %12, %15, %18, %21, %24, %27, %30, %33, %36, %39, %42, %45, %48, %51 in 0 : vector<3x512xf32>, vector<3x512xf32>, vector<3x512xf32>, vector<3x512xf32>, vector<3x512xf32>, vector<3x512xf32>, vector<3x512xf32>, vector<3x512xf32>, vector<3x512xf32>, vector<3x512xf32>, vector<3x512xf32>, vector<3x512xf32>, vector<3x512xf32>, vector<3x512xf32>, vector<3x512xf32>, vector<3x512xf32> -> vector<48x512xf32>
    %cst_21 = arith.constant dense<0.000000e+00> : vector<10x512xf32>
    %53 = tpu.matmul %5, %52, %cst_21 {dimension_numbers = #tpu.dot_dimension_numbers<[1], [0], [0], [1], [0, 0, 1, 1], [], []>} : vector<10x48xf32>, vector<48x512xf32>, vector<10x512xf32> -> vector<10x512xf32>
    %54 = vector.broadcast %6 : vector<10x1xf32> to vector<10x512xf32>
    %55 = arith.addf %53, %54 : vector<10x512xf32>
    %cst_22 = arith.constant 0.000000e+00 : f32
    %56 = vector.broadcast %cst_22 : f32 to vector<10x512xf32>
    %57 = arith.maximumf %55, %56 : vector<10x512xf32>
    %cst_23 = arith.constant 0.000000e+00 : f32
    %58 = vector.broadcast %cst_23 : f32 to vector<10x1xf32>
    %59 = vector.extract_strided_slice %57 {offsets = [0, 1], sizes = [10, 511], strides = [1, 1]} : vector<10x512xf32> to vector<10x511xf32>
    %60 = tpu.concatenate %59, %58 in 1 : vector<10x511xf32>, vector<10x1xf32> -> vector<10x512xf32>
    %61 = arith.maximumf %57, %60 : vector<10x512xf32>
    %cst_24 = arith.constant 0.000000e+00 : f32
    %62 = vector.broadcast %cst_24 : f32 to vector<10x16xf32>
    %63 = vector.extract_strided_slice %61 {offsets = [0, 16], sizes = [10, 496], strides = [1, 1]} : vector<10x512xf32> to vector<10x496xf32>
    %64 = tpu.concatenate %63, %62 in 1 : vector<10x496xf32>, vector<10x16xf32> -> vector<10x512xf32>
    %65 = arith.maximumf %61, %64 : vector<10x512xf32>
    %c10 = arith.constant 10 : index
    %c0_25 = arith.constant 0 : index
    %66 = vector.load %arg1[%c10, %c0_25] : memref<18x161xf32, #tpu.memory_space<vmem>>, vector<8x160xf32>
    %c10_26 = arith.constant 10 : index
    %c160 = arith.constant 160 : index
    %67 = vector.load %arg1[%c10_26, %c160] : memref<18x161xf32, #tpu.memory_space<vmem>>, vector<8x1xf32>
    %cst_27 = arith.constant 0.000000e+00 : f32
    %68 = vector.broadcast %cst_27 : f32 to vector<10x2xf32>
    %69 = vector.extract_strided_slice %65 {offsets = [0, 2], sizes = [10, 510], strides = [1, 1]} : vector<10x512xf32> to vector<10x510xf32>
    %70 = tpu.concatenate %69, %68 in 1 : vector<10x510xf32>, vector<10x2xf32> -> vector<10x512xf32>
    %cst_28 = arith.constant 0.000000e+00 : f32
    %71 = vector.broadcast %cst_28 : f32 to vector<10x4xf32>
    %72 = vector.extract_strided_slice %65 {offsets = [0, 4], sizes = [10, 508], strides = [1, 1]} : vector<10x512xf32> to vector<10x508xf32>
    %73 = tpu.concatenate %72, %71 in 1 : vector<10x508xf32>, vector<10x4xf32> -> vector<10x512xf32>
    %cst_29 = arith.constant 0.000000e+00 : f32
    %74 = vector.broadcast %cst_29 : f32 to vector<10x6xf32>
    %75 = vector.extract_strided_slice %65 {offsets = [0, 6], sizes = [10, 506], strides = [1, 1]} : vector<10x512xf32> to vector<10x506xf32>
    %76 = tpu.concatenate %75, %74 in 1 : vector<10x506xf32>, vector<10x6xf32> -> vector<10x512xf32>
    %cst_30 = arith.constant 0.000000e+00 : f32
    %77 = vector.broadcast %cst_30 : f32 to vector<10x32xf32>
    %78 = vector.extract_strided_slice %65 {offsets = [0, 32], sizes = [10, 480], strides = [1, 1]} : vector<10x512xf32> to vector<10x480xf32>
    %79 = tpu.concatenate %78, %77 in 1 : vector<10x480xf32>, vector<10x32xf32> -> vector<10x512xf32>
    %cst_31 = arith.constant 0.000000e+00 : f32
    %80 = vector.broadcast %cst_31 : f32 to vector<10x34xf32>
    %81 = vector.extract_strided_slice %65 {offsets = [0, 34], sizes = [10, 478], strides = [1, 1]} : vector<10x512xf32> to vector<10x478xf32>
    %82 = tpu.concatenate %81, %80 in 1 : vector<10x478xf32>, vector<10x34xf32> -> vector<10x512xf32>
    %cst_32 = arith.constant 0.000000e+00 : f32
    %83 = vector.broadcast %cst_32 : f32 to vector<10x36xf32>
    %84 = vector.extract_strided_slice %65 {offsets = [0, 36], sizes = [10, 476], strides = [1, 1]} : vector<10x512xf32> to vector<10x476xf32>
    %85 = tpu.concatenate %84, %83 in 1 : vector<10x476xf32>, vector<10x36xf32> -> vector<10x512xf32>
    %cst_33 = arith.constant 0.000000e+00 : f32
    %86 = vector.broadcast %cst_33 : f32 to vector<10x38xf32>
    %87 = vector.extract_strided_slice %65 {offsets = [0, 38], sizes = [10, 474], strides = [1, 1]} : vector<10x512xf32> to vector<10x474xf32>
    %88 = tpu.concatenate %87, %86 in 1 : vector<10x474xf32>, vector<10x38xf32> -> vector<10x512xf32>
    %cst_34 = arith.constant 0.000000e+00 : f32
    %89 = vector.broadcast %cst_34 : f32 to vector<10x64xf32>
    %90 = vector.extract_strided_slice %65 {offsets = [0, 64], sizes = [10, 448], strides = [1, 1]} : vector<10x512xf32> to vector<10x448xf32>
    %91 = tpu.concatenate %90, %89 in 1 : vector<10x448xf32>, vector<10x64xf32> -> vector<10x512xf32>
    %cst_35 = arith.constant 0.000000e+00 : f32
    %92 = vector.broadcast %cst_35 : f32 to vector<10x66xf32>
    %93 = vector.extract_strided_slice %65 {offsets = [0, 66], sizes = [10, 446], strides = [1, 1]} : vector<10x512xf32> to vector<10x446xf32>
    %94 = tpu.concatenate %93, %92 in 1 : vector<10x446xf32>, vector<10x66xf32> -> vector<10x512xf32>
    %cst_36 = arith.constant 0.000000e+00 : f32
    %95 = vector.broadcast %cst_36 : f32 to vector<10x68xf32>
    %96 = vector.extract_strided_slice %65 {offsets = [0, 68], sizes = [10, 444], strides = [1, 1]} : vector<10x512xf32> to vector<10x444xf32>
    %97 = tpu.concatenate %96, %95 in 1 : vector<10x444xf32>, vector<10x68xf32> -> vector<10x512xf32>
    %cst_37 = arith.constant 0.000000e+00 : f32
    %98 = vector.broadcast %cst_37 : f32 to vector<10x70xf32>
    %99 = vector.extract_strided_slice %65 {offsets = [0, 70], sizes = [10, 442], strides = [1, 1]} : vector<10x512xf32> to vector<10x442xf32>
    %100 = tpu.concatenate %99, %98 in 1 : vector<10x442xf32>, vector<10x70xf32> -> vector<10x512xf32>
    %cst_38 = arith.constant 0.000000e+00 : f32
    %101 = vector.broadcast %cst_38 : f32 to vector<10x96xf32>
    %102 = vector.extract_strided_slice %65 {offsets = [0, 96], sizes = [10, 416], strides = [1, 1]} : vector<10x512xf32> to vector<10x416xf32>
    %103 = tpu.concatenate %102, %101 in 1 : vector<10x416xf32>, vector<10x96xf32> -> vector<10x512xf32>
    %cst_39 = arith.constant 0.000000e+00 : f32
    %104 = vector.broadcast %cst_39 : f32 to vector<10x98xf32>
    %105 = vector.extract_strided_slice %65 {offsets = [0, 98], sizes = [10, 414], strides = [1, 1]} : vector<10x512xf32> to vector<10x414xf32>
    %106 = tpu.concatenate %105, %104 in 1 : vector<10x414xf32>, vector<10x98xf32> -> vector<10x512xf32>
    %cst_40 = arith.constant 0.000000e+00 : f32
    %107 = vector.broadcast %cst_40 : f32 to vector<10x100xf32>
    %108 = vector.extract_strided_slice %65 {offsets = [0, 100], sizes = [10, 412], strides = [1, 1]} : vector<10x512xf32> to vector<10x412xf32>
    %109 = tpu.concatenate %108, %107 in 1 : vector<10x412xf32>, vector<10x100xf32> -> vector<10x512xf32>
    %cst_41 = arith.constant 0.000000e+00 : f32
    %110 = vector.broadcast %cst_41 : f32 to vector<10x102xf32>
    %111 = vector.extract_strided_slice %65 {offsets = [0, 102], sizes = [10, 410], strides = [1, 1]} : vector<10x512xf32> to vector<10x410xf32>
    %112 = tpu.concatenate %111, %110 in 1 : vector<10x410xf32>, vector<10x102xf32> -> vector<10x512xf32>
    %113 = tpu.concatenate %65, %70, %73, %76, %79, %82, %85, %88, %91, %94, %97, %100, %103, %106, %109, %112 in 0 : vector<10x512xf32>, vector<10x512xf32>, vector<10x512xf32>, vector<10x512xf32>, vector<10x512xf32>, vector<10x512xf32>, vector<10x512xf32>, vector<10x512xf32>, vector<10x512xf32>, vector<10x512xf32>, vector<10x512xf32>, vector<10x512xf32>, vector<10x512xf32>, vector<10x512xf32>, vector<10x512xf32>, vector<10x512xf32> -> vector<160x512xf32>
    %cst_42 = arith.constant dense<0.000000e+00> : vector<8x512xf32>
    %114 = tpu.matmul %66, %113, %cst_42 {dimension_numbers = #tpu.dot_dimension_numbers<[1], [0], [0], [1], [0, 0, 1, 1], [], []>} : vector<8x160xf32>, vector<160x512xf32>, vector<8x512xf32> -> vector<8x512xf32>
    %115 = vector.broadcast %67 : vector<8x1xf32> to vector<8x512xf32>
    %116 = arith.addf %114, %115 : vector<8x512xf32>
    %cst_43 = arith.constant 0.000000e+00 : f32
    %117 = vector.broadcast %cst_43 : f32 to vector<8x512xf32>
    %118 = arith.maximumf %116, %117 : vector<8x512xf32>
    %cst_44 = arith.constant 0.000000e+00 : f32
    %119 = vector.broadcast %cst_44 : f32 to vector<8x2xf32>
    %120 = vector.extract_strided_slice %118 {offsets = [0, 2], sizes = [8, 510], strides = [1, 1]} : vector<8x512xf32> to vector<8x510xf32>
    %121 = tpu.concatenate %120, %119 in 1 : vector<8x510xf32>, vector<8x2xf32> -> vector<8x512xf32>
    %122 = arith.maximumf %118, %121 : vector<8x512xf32>
    %cst_45 = arith.constant 0.000000e+00 : f32
    %123 = vector.broadcast %cst_45 : f32 to vector<8x32xf32>
    %124 = vector.extract_strided_slice %122 {offsets = [0, 32], sizes = [8, 480], strides = [1, 1]} : vector<8x512xf32> to vector<8x480xf32>
    %125 = tpu.concatenate %124, %123 in 1 : vector<8x480xf32>, vector<8x32xf32> -> vector<8x512xf32>
    %126 = arith.maximumf %122, %125 : vector<8x512xf32>
    %127 = vector.extract_strided_slice %126 {offsets = [0, 0], sizes = [8, 1], strides = [1, 1]} : vector<8x512xf32> to vector<8x1xf32>
    %128 = vector.extract_strided_slice %126 {offsets = [0, 256], sizes = [8, 1], strides = [1, 1]} : vector<8x512xf32> to vector<8x1xf32>
    %129 = tpu.concatenate %127, %128 in 1 : vector<8x1xf32>, vector<8x1xf32> -> vector<8x2xf32>
    %130 = tpu.transpose %129, [1, 0] : vector<8x2xf32> -> vector<2x8xf32>
    %c0_46 = arith.constant 0 : index
    %c0_47 = arith.constant 0 : index
    %131 = vector.load %arg2[%c0_46, %c0_47] : memref<9x256xf32, #tpu.memory_space<vmem>>, vector<8x256xf32>
    %cst_48 = arith.constant dense<0.000000e+00> : vector<2x256xf32>
    %132 = tpu.matmul %130, %131, %cst_48 {dimension_numbers = #tpu.dot_dimension_numbers<[1], [0], [0], [1], [0, 0, 1, 1], [], []>} : vector<2x8xf32>, vector<8x256xf32>, vector<2x256xf32> -> vector<2x256xf32>
    %c8 = arith.constant 8 : index
    %c0_49 = arith.constant 0 : index
    %133 = vector.load %arg2[%c8, %c0_49] : memref<9x256xf32, #tpu.memory_space<vmem>>, vector<1x256xf32>
    %134 = vector.broadcast %133 : vector<1x256xf32> to vector<2x256xf32>
    %135 = arith.addf %132, %134 : vector<2x256xf32>
    %cst_50 = arith.constant 0.000000e+00 : f32
    %136 = vector.broadcast %cst_50 : f32 to vector<2x256xf32>
    %137 = arith.maximumf %135, %136 : vector<2x256xf32>
    %c0_51 = arith.constant 0 : index
    %c0_52 = arith.constant 0 : index
    %138 = vector.load %arg3[%c0_51, %c0_52] : memref<336x64xf32, #tpu.memory_space<vmem>>, vector<256x64xf32>
    %cst_53 = arith.constant dense<0.000000e+00> : vector<2x64xf32>
    %139 = tpu.matmul %137, %138, %cst_53 {dimension_numbers = #tpu.dot_dimension_numbers<[1], [0], [0], [1], [0, 0, 1, 1], [], []>} : vector<2x256xf32>, vector<256x64xf32>, vector<2x64xf32> -> vector<2x64xf32>
    %c256 = arith.constant 256 : index
    %c0_54 = arith.constant 0 : index
    %140 = vector.load %arg3[%c256, %c0_54] : memref<336x64xf32, #tpu.memory_space<vmem>>, vector<1x64xf32>
    %141 = vector.broadcast %140 : vector<1x64xf32> to vector<2x64xf32>
    %142 = arith.addf %139, %141 : vector<2x64xf32>
    %cst_55 = arith.constant 0.000000e+00 : f32
    %143 = vector.broadcast %cst_55 : f32 to vector<2x64xf32>
    %144 = arith.maximumf %142, %143 : vector<2x64xf32>
    %c264 = arith.constant 264 : index
    %c0_56 = arith.constant 0 : index
    %145 = vector.load %arg3[%c264, %c0_56] : memref<336x64xf32, #tpu.memory_space<vmem>>, vector<64x2xf32>
    %cst_57 = arith.constant dense<0.000000e+00> : vector<2x2xf32>
    %146 = tpu.matmul %144, %145, %cst_57 {dimension_numbers = #tpu.dot_dimension_numbers<[1], [0], [0], [1], [0, 0, 1, 1], [], []>} : vector<2x64xf32>, vector<64x2xf32>, vector<2x2xf32> -> vector<2x2xf32>
    %c328 = arith.constant 328 : index
    %c0_58 = arith.constant 0 : index
    %147 = vector.load %arg3[%c328, %c0_58] : memref<336x64xf32, #tpu.memory_space<vmem>>, vector<1x2xf32>
    %148 = vector.broadcast %147 : vector<1x2xf32> to vector<2x2xf32>
    %149 = arith.addf %146, %148 : vector<2x2xf32>
    %c0_59 = arith.constant 0 : index
    %c0_60 = arith.constant 0 : index
    %150 = vector.load %arg4[%c0_59, %c0_60] : memref<2x2xf32, #tpu.memory_space<vmem>>, vector<2x2xf32>
    tpu.vector_store %arg4[%c0_59, %c0_60], %149 {strides = array<i32>} : memref<2x2xf32, #tpu.memory_space<vmem>>, vector<2x2xf32>,
    return
  }
}

</mosaic_0001>

<llo_original>
// kernel: net_forward.1
$region0: #{net_forward.1}
  #allocation0 [shape = 'u32[]', space=smem, size = 0x4, offset = 0x4, fixed_abs, tag = 'smem constant byte address 0x4 - core index']
  #allocation1 [shape = 'u32[144,128]{1,0:T(1,128)}', space=vmem, size = 0x12000, scoped, tag = 'internal scratch']
  %s0 = inlined_call_operand.vmem [shape: f32[2,3,256], index: 0, kind: input, shape index: {}]
  %s1 = inlined_call_operand.vmem [shape: f32[18,161], index: 1, kind: input, shape index: {}]
  %s2 = inlined_call_operand.vmem [shape: f32[9,256], index: 2, kind: input, shape index: {}]
  %s3 = inlined_call_operand.vmem [shape: f32[336,64], index: 3, kind: input, shape index: {}]
  %s4 = inlined_call_operand.hbm [shape: f32[2,2], index: 4, kind: output, shape index: {}]
  %s5 = sld [smem:[#allocation0]]
  $region26: #{net_forward.1} parent=0
    _
  %s7 = ssub.s32 1, %s5
  %s8 = scalar_select 0, %s7, %s5
  $region1: #{net_forward.1} parent=0
    #allocation2 [shape = 'u8[1024]{0}', space=vmem, size = 0x400, scoped, tag = 'output window, operand 0, single buffered']
    #allocation3 [shape = 's32[1]{0}', space=sflag, size = 0x4, scoped, tag = 'scoped memory for net_forward.1']
    %9 = vsyncpa [#allocation3], 0
    // Predicated region
    $region2: #{net_forward.1} parent=1 // pred_check
      _
    $region3: #{net_forward.1} parent=1 // pred_check_branch
      %11 = sbr.rel (0) target = $region5
    $region4: #{net_forward.1} parent=1 // pred_region
      _
    $region5: #{net_forward.1} parent=1 // pred_fallthru
      _
    // Predicated region
    $region6: #{net_forward.1} parent=1 // pred_check
      _
    $region7: #{net_forward.1} parent=1 // pred_check_branch
      %13 = sbr.rel (0) target = $region9
    $region8: #{net_forward.1} parent=1 // pred_region
      _
    $region9: #{net_forward.1} parent=1 // pred_fallthru
      _
    // Predicated region
    $region10: #{net_forward.1} parent=1 // pred_check
      _
    $region11: #{net_forward.1} parent=1 // pred_check_branch
      %15 = sbr.rel (0) target = $region13
    $region12: #{net_forward.1} parent=1 // pred_region
      _
    $region13: #{net_forward.1} parent=1 // pred_fallthru
      _
    // Predicated region
    $region14: #{net_forward.1} parent=1 // pred_check
      _
    $region15: #{net_forward.1} parent=1 // pred_check_branch
      %17 = sbr.rel (0) target = $region17
    $region16: #{net_forward.1} parent=1 // pred_region
      _
    $region17: #{net_forward.1} parent=1 // pred_fallthru
      _
    %v18 = vld [vmem:[%s0] sm:$0x77]
    %s19 = scalar_lea.vmem %s0, 8
    %v20 = vld [vmem:[%s19] sm:$0x77]
    %v22 = vcombine.high %v18, %v18
    %v25 = vcombine.high %v20, %v20
    %v27 = vld [vmem:[%s1] sm:$0xff]
    %v28 = vld [vmem:[%s1 + $0x10] sm:$0x3]
    %29 = vrot.lane.b32.xlu0 %v18, 127
    %v30 = vpop.permute.xlu0 %29
    %31 = vrot.lane.b32.xlu0 %v22, 127
    %v32 = vpop.permute.xlu0 %31
    %33 = vrot.lane.b32.xlu0 %v20, 127
    %v34 = vpop.permute.xlu0 %33
    %35 = vrot.lane.b32.xlu0 %v25, 127
    %v36 = vpop.permute.xlu0 %35
    %vm37 = vcmask 1039360
    %v38 = vsel %vm37, %v30, %v32
    %v39 = vsel %vm37, %v32, %v34
    %v40 = vsel %vm37, %v34, %v36
    %v42 = vsel %vm37, %v36, 0.0
    %43 = vrot.lane.b32.xlu0 %v18, 126
    %v44 = vpop.permute.xlu0 %43
    %45 = vrot.lane.b32.xlu0 %v22, 126
    %v46 = vpop.permute.xlu0 %45
    %47 = vrot.lane.b32.xlu0 %v20, 126
    %v48 = vpop.permute.xlu0 %47
    %49 = vrot.lane.b32.xlu0 %v25, 126
    %v50 = vpop.permute.xlu0 %49
    %vm51 = vcmask 1031168
    %v52 = vsel %vm51, %v44, %v46
    %v53 = vsel %vm51, %v46, %v48
    %v54 = vsel %vm51, %v48, %v50
    %v56 = vsel %vm51, %v50, 0.0
    %57 = vrot.lane.b32.xlu0 %v18, 125
    %v58 = vpop.permute.xlu0 %57
    %59 = vrot.lane.b32.xlu0 %v22, 125
    %v60 = vpop.permute.xlu0 %59
    %61 = vrot.lane.b32.xlu0 %v20, 125
    %v62 = vpop.permute.xlu0 %61
    %63 = vrot.lane.b32.xlu0 %v25, 125
    %v64 = vpop.permute.xlu0 %63
    %vm65 = vcmask 1022976
    %v66 = vsel %vm65, %v58, %v60
    %v67 = vsel %vm65, %v60, %v62
    %v68 = vsel %vm65, %v62, %v64
    %v70 = vsel %vm65, %v64, 0.0
    %71 = vrot.lane.b32.xlu0 %v18, 112
    %v72 = vpop.permute.xlu0 %71
    %73 = vrot.lane.b32.xlu0 %v22, 112
    %v74 = vpop.permute.xlu0 %73
    %75 = vrot.lane.b32.xlu0 %v20, 112
    %v76 = vpop.permute.xlu0 %75
    %77 = vrot.lane.b32.xlu0 %v25, 112
    %v78 = vpop.permute.xlu0 %77
    %vm79 = vcmask 916480
    %v80 = vsel %vm79, %v72, %v74
    %v81 = vsel %vm79, %v74, %v76
    %v82 = vsel %vm79, %v76, %v78
    %v84 = vsel %vm79, %v78, 0.0
    %85 = vrot.lane.b32.xlu0 %v18, 111
    %v86 = vpop.permute.xlu0 %85
    %87 = vrot.lane.b32.xlu0 %v22, 111
    %v88 = vpop.permute.xlu0 %87
    %89 = vrot.lane.b32.xlu0 %v20, 111
    %v90 = vpop.permute.xlu0 %89
    %91 = vrot.lane.b32.xlu0 %v25, 111
    %v92 = vpop.permute.xlu0 %91
    %vm93 = vcmask 908288
    %v94 = vsel %vm93, %v86, %v88
    %v95 = vsel %vm93, %v88, %v90
    %v96 = vsel %vm93, %v90, %v92
    %v98 = vsel %vm93, %v92, 0.0
    %99 = vrot.lane.b32.xlu0 %v18, 110
    %v100 = vpop.permute.xlu0 %99
    %101 = vrot.lane.b32.xlu0 %v22, 110
    %v102 = vpop.permute.xlu0 %101
    %103 = vrot.lane.b32.xlu0 %v20, 110
    %v104 = vpop.permute.xlu0 %103
    %105 = vrot.lane.b32.xlu0 %v25, 110
    %v106 = vpop.permute.xlu0 %105
    %vm107 = vcmask 900096
    %v108 = vsel %vm107, %v100, %v102
    %v109 = vsel %vm107, %v102, %v104
    %v110 = vsel %vm107, %v104, %v106
    %v112 = vsel %vm107, %v106, 0.0
    %113 = vrot.lane.b32.xlu0 %v18, 109
    %v114 = vpop.permute.xlu0 %113
    %115 = vrot.lane.b32.xlu0 %v22, 109
    %v116 = vpop.permute.xlu0 %115
    %117 = vrot.lane.b32.xlu0 %v20, 109
    %v118 = vpop.permute.xlu0 %117
    %119 = vrot.lane.b32.xlu0 %v25, 109
    %v120 = vpop.permute.xlu0 %119
    %vm121 = vcmask 891904
    %v122 = vsel %vm121, %v114, %v116
    %v123 = vsel %vm121, %v116, %v118
    %v124 = vsel %vm121, %v118, %v120
    %v126 = vsel %vm121, %v120, 0.0
    %127 = vrot.lane.b32.xlu0 %v18, 96
    %v128 = vpop.permute.xlu0 %127
    %129 = vrot.lane.b32.xlu0 %v22, 96
    %v130 = vpop.permute.xlu0 %129
    %131 = vrot.lane.b32.xlu0 %v20, 96
    %v132 = vpop.permute.xlu0 %131
    %133 = vrot.lane.b32.xlu0 %v25, 96
    %v134 = vpop.permute.xlu0 %133
    %vm135 = vcmask 785408
    %v136 = vsel %vm135, %v128, %v130
    %v137 = vsel %vm135, %v130, %v132
    %v138 = vsel %vm135, %v132, %v134
    %v143 = vsel %vm135, %v134, 0.0
    %144 = vrot.lane.b32.xlu0 %v18, 95
    %v145 = vpop.permute.xlu0 %144
    %146 = vrot.lane.b32.xlu0 %v22, 95
    %v147 = vpop.permute.xlu0 %146
    %148 = vrot.lane.b32.xlu0 %v20, 95
    %v149 = vpop.permute.xlu0 %148
    %150 = vrot.lane.b32.xlu0 %v25, 95
    %v151 = vpop.permute.xlu0 %150
    %vm152 = vcmask 777216
    %v153 = vsel %vm152, %v145, %v147
    %v154 = vsel %vm152, %v147, %v149
    %v155 = vsel %vm152, %v149, %v151
    %v157 = vsel %vm152, %v151, 0.0
    %158 = vrot.lane.b32.xlu0 %v18, 94
    %v159 = vpop.permute.xlu0 %158
    %160 = vrot.lane.b32.xlu0 %v22, 94
    %v161 = vpop.permute.xlu0 %160
    %162 = vrot.lane.b32.xlu0 %v20, 94
    %v163 = vpop.permute.xlu0 %162
    %164 = vrot.lane.b32.xlu0 %v25, 94
    %v165 = vpop.permute.xlu0 %164
    %vm166 = vcmask 769024
    %v167 = vsel %vm166, %v159, %v161
    %v168 = vsel %vm166, %v161, %v163
    %v169 = vsel %vm166, %v163, %v165
    %v171 = vsel %vm166, %v165, 0.0
    %172 = vrot.lane.b32.xlu0 %v18, 93
    %v173 = vpop.permute.xlu0 %172
    %174 = vrot.lane.b32.xlu0 %v22, 93
    %v175 = vpop.permute.xlu0 %174
    %176 = vrot.lane.b32.xlu0 %v20, 93
    %v177 = vpop.permute.xlu0 %176
    %178 = vrot.lane.b32.xlu0 %v25, 93
    %v179 = vpop.permute.xlu0 %178
    %vm180 = vcmask 760832
    %v181 = vsel %vm180, %v173, %v175
    %v182 = vsel %vm180, %v175, %v177
    %v183 = vsel %vm180, %v177, %v179
    %v185 = vsel %vm180, %v179, 0.0
    %186 = vrot.lane.b32.xlu0 %v18, 80
    %v187 = vpop.permute.xlu0 %186
    %188 = vrot.lane.b32.xlu0 %v22, 80
    %v189 = vpop.permute.xlu0 %188
    %190 = vrot.lane.b32.xlu0 %v20, 80
    %v191 = vpop.permute.xlu0 %190
    %192 = vrot.lane.b32.xlu0 %v25, 80
    %v193 = vpop.permute.xlu0 %192
    %vm194 = vcmask 654336
    %v195 = vsel %vm194, %v187, %v189
    %v196 = vsel %vm194, %v189, %v191
    %v197 = vsel %vm194, %v191, %v193
    %v199 = vsel %vm194, %v193, 0.0
    %200 = vrot.lane.b32.xlu0 %v18, 79
    %v201 = vpop.permute.xlu0 %200
    %202 = vrot.lane.b32.xlu0 %v22, 79
    %v203 = vpop.permute.xlu0 %202
    %204 = vrot.lane.b32.xlu0 %v20, 79
    %v205 = vpop.permute.xlu0 %204
    %206 = vrot.lane.b32.xlu0 %v25, 79
    %v207 = vpop.permute.xlu0 %206
    %vm208 = vcmask 646144
    %v209 = vsel %vm208, %v201, %v203
    %v210 = vsel %vm208, %v203, %v205
    %v211 = vsel %vm208, %v205, %v207
    %v213 = vsel %vm208, %v207, 0.0
    %214 = vrot.lane.b32.xlu0 %v18, 78
    %v215 = vpop.permute.xlu0 %214
    %216 = vrot.lane.b32.xlu0 %v22, 78
    %v217 = vpop.permute.xlu0 %216
    %218 = vrot.lane.b32.xlu0 %v20, 78
    %v219 = vpop.permute.xlu0 %218
    %220 = vrot.lane.b32.xlu0 %v25, 78
    %v221 = vpop.permute.xlu0 %220
    %vm222 = vcmask 637952
    %v223 = vsel %vm222, %v215, %v217
    %v224 = vsel %vm222, %v217, %v219
    %v225 = vsel %vm222, %v219, %v221
    %v227 = vsel %vm222, %v221, 0.0
    %228 = vrot.lane.b32.xlu0 %v18, 77
    %v229 = vpop.permute.xlu0 %228
    %230 = vrot.lane.b32.xlu0 %v22, 77
    %v231 = vpop.permute.xlu0 %230
    %232 = vrot.lane.b32.xlu0 %v20, 77
    %v233 = vpop.permute.xlu0 %232
    %234 = vrot.lane.b32.xlu0 %v25, 77
    %v235 = vpop.permute.xlu0 %234
    %vm236 = vcmask 629760
    %v237 = vsel %vm236, %v229, %v231
    %v238 = vsel %vm236, %v231, %v233
    %v239 = vsel %vm236, %v233, %v235
    %v241 = vsel %vm236, %v235, 0.0
    %v243 = vrot.slane %v38, 5
    %v244 = vrot.slane %v39, 5
    %v245 = vrot.slane %v40, 5
    %v246 = vrot.slane %v42, 5
    %v252 = vrot.slane %v52, 2
    %v253 = vrot.slane %v53, 2
    %v254 = vrot.slane %v54, 2
    %v255 = vrot.slane %v56, 2
    %v261 = vrot.slane %v66, 7
    %v262 = vrot.slane %v67, 7
    %v263 = vrot.slane %v68, 7
    %v264 = vrot.slane %v70, 7
    %v270 = vrot.slane %v80, 4
    %v271 = vrot.slane %v81, 4
    %v272 = vrot.slane %v82, 4
    %v273 = vrot.slane %v84, 4
    %v279 = vrot.slane %v94, 1
    %v280 = vrot.slane %v95, 1
    %v281 = vrot.slane %v96, 1
    %v282 = vrot.slane %v98, 1
    %v288 = vrot.slane %v108, 6
    %v289 = vrot.slane %v109, 6
    %v290 = vrot.slane %v110, 6
    %v291 = vrot.slane %v112, 6
    %v297 = vrot.slane %v122, 3
    %v298 = vrot.slane %v123, 3
    %v299 = vrot.slane %v124, 3
    %v300 = vrot.slane %v126, 3
    %v306 = vrot.slane %v153, 5
    %v307 = vrot.slane %v154, 5
    %v308 = vrot.slane %v155, 5
    %v309 = vrot.slane %v157, 5
    %v315 = vrot.slane %v167, 2
    %v316 = vrot.slane %v168, 2
    %v317 = vrot.slane %v169, 2
    %v318 = vrot.slane %v171, 2
    %v324 = vrot.slane %v181, 7
    %v325 = vrot.slane %v182, 7
    %v326 = vrot.slane %v183, 7
    %v327 = vrot.slane %v185, 7
    %v333 = vrot.slane %v195, 4
    %v334 = vrot.slane %v196, 4
    %v335 = vrot.slane %v197, 4
    %v336 = vrot.slane %v199, 4
    %v342 = vrot.slane %v209, 1
    %v343 = vrot.slane %v210, 1
    %v344 = vrot.slane %v211, 1
    %v345 = vrot.slane %v213, 1
    %v351 = vrot.slane %v223, 6
    %v352 = vrot.slane %v224, 6
    %v353 = vrot.slane %v225, 6
    %v354 = vrot.slane %v227, 6
    %v360 = vrot.slane %v237, 3
    %v361 = vrot.slane %v238, 3
    %v362 = vrot.slane %v239, 3
    %v363 = vrot.slane %v241, 3
    %vm368 = vcmask 1042432
    %v369 = vsel %vm368, %v18, %v243
    %v370 = vsel %vm368, %v22, %v244
    %v371 = vsel %vm368, %v20, %v245
    %v372 = vsel %vm368, %v25, %v246
    %vm373 = vcmask 1045504
    %v374 = vsel %vm373, %v369, %v252
    %v375 = vsel %vm373, %v370, %v253
    %v376 = vsel %vm373, %v371, %v254
    %v377 = vsel %vm373, %v372, %v255
    %vm378 = vcmask 1040384
    %v379 = vsel %vm378, %v252, %v261
    %v380 = vsel %vm378, %v253, %v262
    %v381 = vsel %vm378, %v254, %v263
    %v382 = vsel %vm378, %v255, %v264
    %vm383 = vcmask 1043456
    %v384 = vsel %vm383, %v379, %v270
    %v385 = vsel %vm383, %v380, %v271
    %v386 = vsel %vm383, %v381, %v272
    %v387 = vsel %vm383, %v382, %v273
    %vm388 = vcmask 1046528
    %v389 = vsel %vm388, %v384, %v279
    %v390 = vsel %vm388, %v385, %v280
    %v391 = vsel %vm388, %v386, %v281
    %v392 = vsel %vm388, %v387, %v282
    %vm393 = vcmask 1041408
    %v394 = vsel %vm393, %v279, %v288
    %v395 = vsel %vm393, %v280, %v289
    %v396 = vsel %vm393, %v281, %v290
    %v397 = vsel %vm393, %v282, %v291
    %vm398 = vcmask 1044480
    %v399 = vsel %vm398, %v394, %v297
    %v400 = vsel %vm398, %v395, %v298
    %v401 = vsel %vm398, %v396, %v299
    %v402 = vsel %vm398, %v397, %v300
    %v403 = vsel %vm368, %v136, %v306
    %v404 = vsel %vm368, %v137, %v307
    %v405 = vsel %vm368, %v138, %v308
    %v406 = vsel %vm368, %v143, %v309
    %v407 = vsel %vm373, %v403, %v315
    %v408 = vsel %vm373, %v404, %v316
    %v409 = vsel %vm373, %v405, %v317
    %v410 = vsel %vm373, %v406, %v318
    %v411 = vsel %vm378, %v315, %v324
    %v412 = vsel %vm378, %v316, %v325
    %v413 = vsel %vm378, %v317, %v326
    %v414 = vsel %vm378, %v318, %v327
    %v415 = vsel %vm383, %v411, %v333
    %v416 = vsel %vm383, %v412, %v334
    %v417 = vsel %vm383, %v413, %v335
    %v418 = vsel %vm383, %v414, %v336
    %v419 = vsel %vm388, %v415, %v342
    %v420 = vsel %vm388, %v416, %v343
    %v421 = vsel %vm388, %v417, %v344
    %v422 = vsel %vm388, %v418, %v345
    %v423 = vsel %vm393, %v342, %v351
    %v424 = vsel %vm393, %v343, %v352
    %v425 = vsel %vm393, %v344, %v353
    %v426 = vsel %vm393, %v345, %v354
    %v427 = vsel %vm398, %v423, %v360
    %v428 = vsel %vm398, %v424, %v361
    %v429 = vsel %vm398, %v425, %v362
    %v430 = vsel %vm398, %v426, %v363
    %432 = vset.pattern.permute.xlu0 48
    %433 = vperm.xlu0 %432, %v27
    %v434 = vpop.permute.xlu0 %433
    %437 = vset.pattern.permute.xlu0 48
    %438 = vperm.xlu0 %437, %v28
    %v439 = vpop.permute.xlu0 %438
    %vm441 = vcmask 392192
    %v442 = vsel %vm441, %v27, 0
    %v444 = vsel %vm441, %v28, 0
    %446 = vmatprep.subr.mxu0 %v375
    %447 = vmatpush1.msra.mxu0 %v374
    %448 = vmatprep.subr.mxu0 %v390
    %449 = vmatpush1.msra.mxu0 %v389
    %450 = vmatprep.subr.mxu0 %v400
    %451 = vmatpush1.msra.mxu0 %v399
    %452 = vmatprep.subr.mxu0 %v408
    %453 = vmatpush1.msra.mxu0 %v407
    %454 = vmatprep.subr.mxu0 %v420
    %455 = vmatpush1.msra.mxu0 %v419
    %456 = vmatprep.subr.mxu0 %v428
    %457 = vmatpush1.msra.mxu0 %v427
    %458 = vmatprep.subr.mxu0 0.0
    %459 = vmatpush1.msra.mxu0 0.0
    %460 = vmatprep.subr.mxu0 0.0
    %461 = vmatpush1.msra.mxu0 0.0
    %462 = vmatprep.subr.mxu0 0.0
    %463 = vmatpush1.msra.mxu0 0.0
    %464 = vmatprep.subr.mxu0 0.0
    %465 = vmatpush1.msra.mxu0 0.0
    %466 = vmatprep.subr.mxu0 0.0
    %467 = vmatpush1.msra.mxu0 0.0
    %468 = vmatprep.subr.mxu0 0.0
    %469 = vmatpush1.msra.mxu0 0.0
    %470 = vmatprep.subr.mxu0 0.0
    %471 = vmatpush1.msra.mxu0 0.0
    %472 = vmatprep.subr.mxu0 0.0
    %473 = vmatpush1.msra.mxu0 0.0
    %474 = vmatprep.subr.mxu0 0.0
    %475 = vmatpush1.msra.mxu0 0.0
    %476 = vmatprep.subr.mxu0 0.0
    %477 = vmatpush1.msra.mxu0 0.0
    %478 = vmatprep.subr.mxu0 0.0
    %479 = vmatpush1.msra.mxu0 0.0
    %480 = vmatprep.subr.mxu0 0.0
    %481 = vmatpush1.msra.mxu0 0.0
    %482 = vmatprep.subr.mxu0 0.0
    %483 = vmatpush1.msra.mxu0 0.0
    %484 = vmatprep.subr.mxu0 0.0
    %485 = vmatpush1.msra.mxu0 0.0
    %486 = vmatprep.subr.mxu0 0.0
    %487 = vmatpush1.msra.mxu0 0.0
    %488 = vmatprep.subr.mxu0 0.0
    %489 = vmatpush1.msra.mxu0 0.0
    %490 = vmatprep.subr.mxu0 0.0
    %491 = vmatpush1.msra.mxu0 0.0
    %492 = vmatprep.subr.mxu0 0.0
    %493 = vmatpush1.msra.mxu0 0.0
    %494 = vmatprep.subr.mxu0 0.0
    %495 = vmatpush1.msra.mxu0 0.0
    %496 = vmatprep.subr.mxu0 0.0
    %497 = vmatpush1.msra.mxu0 0.0
    %498 = vmatprep.subr.mxu0 0.0
    %499 = vmatpush1.msra.mxu0 0.0
    %500 = vmatprep.subr.mxu0 0.0
    %501 = vmatpush1.msra.mxu0 0.0
    %502 = vmatprep.subr.mxu0 0.0
    %503 = vmatpush1.msra.mxu0 0.0
    %504 = vmatprep.subr.mxu0 0.0
    %505 = vmatpush1.msra.mxu0 0.0
    %506 = vmatprep.subr.mxu0 0.0
    %507 = vmatpush1.msra.mxu0 0.0
    %508 = vmatprep.subr.mxu0 0.0
    %509 = vmatpush1.msra.mxu0 0.0
    %510 = vmatprep.mubr.f32.mxu0 0.0
    %511 = vmatmul.mubr.f32.gmra.mrb[0].mxu0 %v442
    %v512 = vpop.f32.mrb[0].mxu0
    %v513 = vadd.f32 %v434, %v512
    %v514 = vpop.f32.mrb[0].mxu0
    %v515 = vadd.f32 %v434, %v514
    %516 = vmatprep.mubr.f32.mxu0 0.0
    %517 = vmatmul.mubr.f32.gmra.mrb[0].mxu0 %v444
    %v518 = vpop.f32.mrb[0].mxu0
    %v519 = vadd.f32 %v439, %v518
    %v520 = vpop.f32.mrb[0].mxu0
    %v521 = vadd.f32 %v439, %v520
    %522 = vdwg.mxu0
    %523 = vmatprep.subr.mxu0 %v377
    %524 = vmatpush1.msra.mxu0 %v376
    %525 = vmatprep.subr.mxu0 %v392
    %526 = vmatpush1.msra.mxu0 %v391
    %527 = vmatprep.subr.mxu0 %v402
    %528 = vmatpush1.msra.mxu0 %v401
    %529 = vmatprep.subr.mxu0 %v410
    %530 = vmatpush1.msra.mxu0 %v409
    %531 = vmatprep.subr.mxu0 %v422
    %532 = vmatpush1.msra.mxu0 %v421
    %533 = vmatprep.subr.mxu0 %v430
    %534 = vmatpush1.msra.mxu0 %v429
    %535 = vmatprep.subr.mxu0 0.0
    %536 = vmatpush1.msra.mxu0 0.0
    %537 = vmatprep.subr.mxu0 0.0
    %538 = vmatpush1.msra.mxu0 0.0
    %539 = vmatprep.subr.mxu0 0.0
    %540 = vmatpush1.msra.mxu0 0.0
    %541 = vmatprep.subr.mxu0 0.0
    %542 = vmatpush1.msra.mxu0 0.0
    %543 = vmatprep.subr.mxu0 0.0
    %544 = vmatpush1.msra.mxu0 0.0
    %545 = vmatprep.subr.mxu0 0.0
    %546 = vmatpush1.msra.mxu0 0.0
    %547 = vmatprep.subr.mxu0 0.0
    %548 = vmatpush1.msra.mxu0 0.0
    %549 = vmatprep.subr.mxu0 0.0
    %550 = vmatpush1.msra.mxu0 0.0
    %551 = vmatprep.subr.mxu0 0.0
    %552 = vmatpush1.msra.mxu0 0.0
    %553 = vmatprep.subr.mxu0 0.0
    %554 = vmatpush1.msra.mxu0 0.0
    %555 = vmatprep.subr.mxu0 0.0
    %556 = vmatpush1.msra.mxu0 0.0
    %557 = vmatprep.subr.mxu0 0.0
    %558 = vmatpush1.msra.mxu0 0.0
    %559 = vmatprep.subr.mxu0 0.0
    %560 = vmatpush1.msra.mxu0 0.0
    %561 = vmatprep.subr.mxu0 0.0
    %562 = vmatpush1.msra.mxu0 0.0
    %563 = vmatprep.subr.mxu0 0.0
    %564 = vmatpush1.msra.mxu0 0.0
    %565 = vmatprep.subr.mxu0 0.0
    %566 = vmatpush1.msra.mxu0 0.0
    %567 = vmatprep.subr.mxu0 0.0
    %568 = vmatpush1.msra.mxu0 0.0
    %569 = vmatprep.subr.mxu0 0.0
    %570 = vmatpush1.msra.mxu0 0.0
    %571 = vmatprep.subr.mxu0 0.0
    %572 = vmatpush1.msra.mxu0 0.0
    %573 = vmatprep.subr.mxu0 0.0
    %574 = vmatpush1.msra.mxu0 0.0
    %575 = vmatprep.subr.mxu0 0.0
    %576 = vmatpush1.msra.mxu0 0.0
    %577 = vmatprep.subr.mxu0 0.0
    %578 = vmatpush1.msra.mxu0 0.0
    %579 = vmatprep.subr.mxu0 0.0
    %580 = vmatpush1.msra.mxu0 0.0
    %581 = vmatprep.subr.mxu0 0.0
    %582 = vmatpush1.msra.mxu0 0.0
    %583 = vmatprep.subr.mxu0 0.0
    %584 = vmatpush1.msra.mxu0 0.0
    %585 = vmatprep.subr.mxu0 0.0
    %586 = vmatpush1.msra.mxu0 0.0
    %587 = vmatprep.mubr.f32.mxu0 0.0
    %588 = vmatmul.mubr.f32.gmra.mrb[0].mxu0 %v442
    %v589 = vpop.f32.mrb[0].mxu0
    %v590 = vadd.f32 %v434, %v589
    %v591 = vpop.f32.mrb[0].mxu0
    %v592 = vadd.f32 %v434, %v591
    %593 = vmatprep.mubr.f32.mxu0 0.0
    %594 = vmatmul.mubr.f32.gmra.mrb[0].mxu0 %v444
    %v595 = vpop.f32.mrb[0].mxu0
    %v596 = vadd.f32 %v439, %v595
    %v597 = vpop.f32.mrb[0].mxu0
    %v598 = vadd.f32 %v439, %v597
    %599 = vdwg.mxu0
    %v600 = vmax.f32 %v513, 0.0
    %v601 = vmax.f32 %v515, 0.0
    %v602 = vmax.f32 %v590, 0.0
    %v603 = vmax.f32 %v592, 0.0
    %v604 = vmax.f32 %v519, 0.0
    %v605 = vmax.f32 %v521, 0.0
    %v606 = vmax.f32 %v596, 0.0
    %v607 = vmax.f32 %v598, 0.0
    %616 = vrot.lane.b32.xlu0 %v600, 127
    %v617 = vpop.permute.xlu0 %616
    %618 = vrot.lane.b32.xlu0 %v601, 127
    %v619 = vpop.permute.xlu0 %618
    %620 = vrot.lane.b32.xlu0 %v602, 127
    %v621 = vpop.permute.xlu0 %620
    %622 = vrot.lane.b32.xlu0 %v603, 127
    %v623 = vpop.permute.xlu0 %622
    %624 = vrot.lane.b32.xlu0 %v604, 127
    %v625 = vpop.permute.xlu0 %624
    %626 = vrot.lane.b32.xlu0 %v605, 127
    %v627 = vpop.permute.xlu0 %626
    %628 = vrot.lane.b32.xlu0 %v606, 127
    %v629 = vpop.permute.xlu0 %628
    %630 = vrot.lane.b32.xlu0 %v607, 127
    %v631 = vpop.permute.xlu0 %630
    %v632 = vsel %vm37, %v617, %v619
    %v633 = vsel %vm37, %v619, %v621
    %v634 = vsel %vm37, %v621, %v623
    %v635 = vsel %vm37, %v625, %v627
    %v636 = vsel %vm37, %v627, %v629
    %v637 = vsel %vm37, %v629, %v631
    %v646 = vsel %vm37, %v623, 0.0
    %v647 = vsel %vm37, %v631, 0.0
    %v648 = vmax.f32 %v600, %v632
    %v649 = vmax.f32 %v601, %v633
    %v650 = vmax.f32 %v602, %v634
    %v651 = vmax.f32 %v603, %v646
    %v652 = vmax.f32 %v604, %v635
    %v653 = vmax.f32 %v605, %v636
    %v654 = vmax.f32 %v606, %v637
    %v655 = vmax.f32 %v607, %v647
    %664 = vrot.lane.b32.xlu0 %v648, 112
    %v665 = vpop.permute.xlu0 %664
    %666 = vrot.lane.b32.xlu0 %v649, 112
    %v667 = vpop.permute.xlu0 %666
    %668 = vrot.lane.b32.xlu0 %v650, 112
    %v669 = vpop.permute.xlu0 %668
    %670 = vrot.lane.b32.xlu0 %v651, 112
    %v671 = vpop.permute.xlu0 %670
    %672 = vrot.lane.b32.xlu0 %v652, 112
    %v673 = vpop.permute.xlu0 %672
    %674 = vrot.lane.b32.xlu0 %v653, 112
    %v675 = vpop.permute.xlu0 %674
    %676 = vrot.lane.b32.xlu0 %v654, 112
    %v677 = vpop.permute.xlu0 %676
    %678 = vrot.lane.b32.xlu0 %v655, 112
    %v679 = vpop.permute.xlu0 %678
    %v680 = vsel %vm79, %v665, %v667
    %v681 = vsel %vm79, %v667, %v669
    %v682 = vsel %vm79, %v669, %v671
    %v683 = vsel %vm79, %v673, %v675
    %v684 = vsel %vm79, %v675, %v677
    %v685 = vsel %vm79, %v677, %v679
    %v694 = vsel %vm79, %v671, 0.0
    %v695 = vsel %vm79, %v679, 0.0
    %v696 = vmax.f32 %v648, %v680
    %v697 = vmax.f32 %v649, %v681
    %v698 = vmax.f32 %v650, %v682
    %v699 = vmax.f32 %v651, %v694
    %v700 = vmax.f32 %v652, %v683
    %v701 = vmax.f32 %v653, %v684
    %v702 = vmax.f32 %v654, %v685
    %v703 = vmax.f32 %v655, %v695
    %v704 = vld [vmem:[%s1 + $0x10] sm:$0xfc]
    %v705 = vld [vmem:[%s1 + $0x18] sm:$0xfc]
    %v706 = vld [vmem:[%s1 + $0x20] sm:$0x3]
    %v707 = vld [vmem:[%s1 + $0x28] sm:$0x3]
    %716 = vrot.lane.b32.xlu0 %v696, 126
    %v717 = vpop.permute.xlu0 %716
    %718 = vrot.lane.b32.xlu0 %v697, 126
    %v719 = vpop.permute.xlu0 %718
    %720 = vrot.lane.b32.xlu0 %v698, 126
    %v721 = vpop.permute.xlu0 %720
    %722 = vrot.lane.b32.xlu0 %v699, 126
    %v723 = vpop.permute.xlu0 %722
    %724 = vrot.lane.b32.xlu0 %v700, 126
    %v725 = vpop.permute.xlu0 %724
    %726 = vrot.lane.b32.xlu0 %v701, 126
    %v727 = vpop.permute.xlu0 %726
    %728 = vrot.lane.b32.xlu0 %v702, 126
    %v729 = vpop.permute.xlu0 %728
    %730 = vrot.lane.b32.xlu0 %v703, 126
    %v731 = vpop.permute.xlu0 %730
    %v732 = vsel %vm51, %v717, %v719
    %v733 = vsel %vm51, %v719, %v721
    %v734 = vsel %vm51, %v721, %v723
    %v735 = vsel %vm51, %v725, %v727
    %v736 = vsel %vm51, %v727, %v729
    %v737 = vsel %vm51, %v729, %v731
    %v740 = vsel %vm51, %v723, 0.0
    %v741 = vsel %vm51, %v731, 0.0
    %742 = vrot.lane.b32.xlu0 %v696, 124
    %v743 = vpop.permute.xlu0 %742
    %744 = vrot.lane.b32.xlu0 %v697, 124
    %v745 = vpop.permute.xlu0 %744
    %746 = vrot.lane.b32.xlu0 %v698, 124
    %v747 = vpop.permute.xlu0 %746
    %748 = vrot.lane.b32.xlu0 %v699, 124
    %v749 = vpop.permute.xlu0 %748
    %750 = vrot.lane.b32.xlu0 %v700, 124
    %v751 = vpop.permute.xlu0 %750
    %752 = vrot.lane.b32.xlu0 %v701, 124
    %v753 = vpop.permute.xlu0 %752
    %754 = vrot.lane.b32.xlu0 %v702, 124
    %v755 = vpop.permute.xlu0 %754
    %756 = vrot.lane.b32.xlu0 %v703, 124
    %v757 = vpop.permute.xlu0 %756
    %vm758 = vcmask 1014784
    %v759 = vsel %vm758, %v743, %v745
    %v760 = vsel %vm758, %v745, %v747
    %v761 = vsel %vm758, %v747, %v749
    %v762 = vsel %vm758, %v751, %v753
    %v763 = vsel %vm758, %v753, %v755
    %v764 = vsel %vm758, %v755, %v757
    %v767 = vsel %vm758, %v749, 0.0
    %v768 = vsel %vm758, %v757, 0.0
    %769 = vrot.lane.b32.xlu0 %v696, 122
    %v770 = vpop.permute.xlu0 %769
    %771 = vrot.lane.b32.xlu0 %v697, 122
    %v772 = vpop.permute.xlu0 %771
    %773 = vrot.lane.b32.xlu0 %v698, 122
    %v774 = vpop.permute.xlu0 %773
    %775 = vrot.lane.b32.xlu0 %v699, 122
    %v776 = vpop.permute.xlu0 %775
    %777 = vrot.lane.b32.xlu0 %v700, 122
    %v778 = vpop.permute.xlu0 %777
    %779 = vrot.lane.b32.xlu0 %v701, 122
    %v780 = vpop.permute.xlu0 %779
    %781 = vrot.lane.b32.xlu0 %v702, 122
    %v782 = vpop.permute.xlu0 %781
    %783 = vrot.lane.b32.xlu0 %v703, 122
    %v784 = vpop.permute.xlu0 %783
    %vm785 = vcmask 998400
    %v786 = vsel %vm785, %v770, %v772
    %v787 = vsel %vm785, %v772, %v774
    %v788 = vsel %vm785, %v774, %v776
    %v789 = vsel %vm785, %v778, %v780
    %v790 = vsel %vm785, %v780, %v782
    %v791 = vsel %vm785, %v782, %v784
    %v794 = vsel %vm785, %v776, 0.0
    %v795 = vsel %vm785, %v784, 0.0
    %796 = vrot.lane.b32.xlu0 %v696, 96
    %v797 = vpop.permute.xlu0 %796
    %798 = vrot.lane.b32.xlu0 %v697, 96
    %v799 = vpop.permute.xlu0 %798
    %800 = vrot.lane.b32.xlu0 %v698, 96
    %v801 = vpop.permute.xlu0 %800
    %802 = vrot.lane.b32.xlu0 %v699, 96
    %v803 = vpop.permute.xlu0 %802
    %804 = vrot.lane.b32.xlu0 %v700, 96
    %v805 = vpop.permute.xlu0 %804
    %806 = vrot.lane.b32.xlu0 %v701, 96
    %v807 = vpop.permute.xlu0 %806
    %808 = vrot.lane.b32.xlu0 %v702, 96
    %v809 = vpop.permute.xlu0 %808
    %810 = vrot.lane.b32.xlu0 %v703, 96
    %v811 = vpop.permute.xlu0 %810
    %v812 = vsel %vm135, %v797, %v799
    %v813 = vsel %vm135, %v799, %v801
    %v814 = vsel %vm135, %v801, %v803
    %v815 = vsel %vm135, %v805, %v807
    %v816 = vsel %vm135, %v807, %v809
    %v817 = vsel %vm135, %v809, %v811
    %v826 = vsel %vm135, %v803, 0.0
    %v827 = vsel %vm135, %v811, 0.0
    %828 = vrot.lane.b32.xlu0 %v696, 94
    %v829 = vpop.permute.xlu0 %828
    %830 = vrot.lane.b32.xlu0 %v697, 94
    %v831 = vpop.permute.xlu0 %830
    %832 = vrot.lane.b32.xlu0 %v698, 94
    %v833 = vpop.permute.xlu0 %832
    %834 = vrot.lane.b32.xlu0 %v699, 94
    %v835 = vpop.permute.xlu0 %834
    %836 = vrot.lane.b32.xlu0 %v700, 94
    %v837 = vpop.permute.xlu0 %836
    %838 = vrot.lane.b32.xlu0 %v701, 94
    %v839 = vpop.permute.xlu0 %838
    %840 = vrot.lane.b32.xlu0 %v702, 94
    %v841 = vpop.permute.xlu0 %840
    %842 = vrot.lane.b32.xlu0 %v703, 94
    %v843 = vpop.permute.xlu0 %842
    %v844 = vsel %vm166, %v829, %v831
    %v845 = vsel %vm166, %v831, %v833
    %v846 = vsel %vm166, %v833, %v835
    %v847 = vsel %vm166, %v837, %v839
    %v848 = vsel %vm166, %v839, %v841
    %v849 = vsel %vm166, %v841, %v843
    %v852 = vsel %vm166, %v835, 0.0
    %v853 = vsel %vm166, %v843, 0.0
    %854 = vrot.lane.b32.xlu0 %v696, 92
    %v855 = vpop.permute.xlu0 %854
    %856 = vrot.lane.b32.xlu0 %v697, 92
    %v857 = vpop.permute.xlu0 %856
    %858 = vrot.lane.b32.xlu0 %v698, 92
    %v859 = vpop.permute.xlu0 %858
    %860 = vrot.lane.b32.xlu0 %v699, 92
    %v861 = vpop.permute.xlu0 %860
    %862 = vrot.lane.b32.xlu0 %v700, 92
    %v863 = vpop.permute.xlu0 %862
    %864 = vrot.lane.b32.xlu0 %v701, 92
    %v865 = vpop.permute.xlu0 %864
    %866 = vrot.lane.b32.xlu0 %v702, 92
    %v867 = vpop.permute.xlu0 %866
    %868 = vrot.lane.b32.xlu0 %v703, 92
    %v869 = vpop.permute.xlu0 %868
    %vm870 = vcmask 752640
    %v871 = vsel %vm870, %v855, %v857
    %v872 = vsel %vm870, %v857, %v859
    %v873 = vsel %vm870, %v859, %v861
    %v874 = vsel %vm870, %v863, %v865
    %v875 = vsel %vm870, %v865, %v867
    %v876 = vsel %vm870, %v867, %v869
    %v879 = vsel %vm870, %v861, 0.0
    %v880 = vsel %vm870, %v869, 0.0
    %881 = vrot.lane.b32.xlu0 %v696, 90
    %v882 = vpop.permute.xlu0 %881
    %883 = vrot.lane.b32.xlu0 %v697, 90
    %v884 = vpop.permute.xlu0 %883
    %885 = vrot.lane.b32.xlu0 %v698, 90
    %v886 = vpop.permute.xlu0 %885
    %887 = vrot.lane.b32.xlu0 %v699, 90
    %v888 = vpop.permute.xlu0 %887
    %889 = vrot.lane.b32.xlu0 %v700, 90
    %v890 = vpop.permute.xlu0 %889
    %891 = vrot.lane.b32.xlu0 %v701, 90
    %v892 = vpop.permute.xlu0 %891
    %893 = vrot.lane.b32.xlu0 %v702, 90
    %v894 = vpop.permute.xlu0 %893
    %895 = vrot.lane.b32.xlu0 %v703, 90
    %v896 = vpop.permute.xlu0 %895
    %vm897 = vcmask 736256
    %v898 = vsel %vm897, %v882, %v884
    %v899 = vsel %vm897, %v884, %v886
    %v900 = vsel %vm897, %v886, %v888
    %v901 = vsel %vm897, %v890, %v892
    %v902 = vsel %vm897, %v892, %v894
    %v903 = vsel %vm897, %v894, %v896
    %v906 = vsel %vm897, %v888, 0.0
    %v907 = vsel %vm897, %v896, 0.0
    %908 = vrot.lane.b32.xlu0 %v696, 64
    %v909 = vpop.permute.xlu0 %908
    %910 = vrot.lane.b32.xlu0 %v697, 64
    %v911 = vpop.permute.xlu0 %910
    %912 = vrot.lane.b32.xlu0 %v698, 64
    %v913 = vpop.permute.xlu0 %912
    %914 = vrot.lane.b32.xlu0 %v699, 64
    %v915 = vpop.permute.xlu0 %914
    %916 = vrot.lane.b32.xlu0 %v700, 64
    %v917 = vpop.permute.xlu0 %916
    %918 = vrot.lane.b32.xlu0 %v701, 64
    %v919 = vpop.permute.xlu0 %918
    %920 = vrot.lane.b32.xlu0 %v702, 64
    %v921 = vpop.permute.xlu0 %920
    %922 = vrot.lane.b32.xlu0 %v703, 64
    %v923 = vpop.permute.xlu0 %922
    %vm924 = vcmask 523264
    %v925 = vsel %vm924, %v909, %v911
    %v926 = vsel %vm924, %v911, %v913
    %v927 = vsel %vm924, %v913, %v915
    %v928 = vsel %vm924, %v917, %v919
    %v929 = vsel %vm924, %v919, %v921
    %v930 = vsel %vm924, %v921, %v923
    %v939 = vsel %vm924, %v915, 0.0
    %v940 = vsel %vm924, %v923, 0.0
    %941 = vrot.lane.b32.xlu0 %v696, 62
    %v942 = vpop.permute.xlu0 %941
    %943 = vrot.lane.b32.xlu0 %v697, 62
    %v944 = vpop.permute.xlu0 %943
    %945 = vrot.lane.b32.xlu0 %v698, 62
    %v946 = vpop.permute.xlu0 %945
    %947 = vrot.lane.b32.xlu0 %v699, 62
    %v948 = vpop.permute.xlu0 %947
    %949 = vrot.lane.b32.xlu0 %v700, 62
    %v950 = vpop.permute.xlu0 %949
    %951 = vrot.lane.b32.xlu0 %v701, 62
    %v952 = vpop.permute.xlu0 %951
    %953 = vrot.lane.b32.xlu0 %v702, 62
    %v954 = vpop.permute.xlu0 %953
    %955 = vrot.lane.b32.xlu0 %v703, 62
    %v956 = vpop.permute.xlu0 %955
    %vm957 = vcmask 506880
    %v958 = vsel %vm957, %v942, %v944
    %v959 = vsel %vm957, %v944, %v946
    %v960 = vsel %vm957, %v946, %v948
    %v961 = vsel %vm957, %v950, %v952
    %v962 = vsel %vm957, %v952, %v954
    %v963 = vsel %vm957, %v954, %v956
    %v966 = vsel %vm957, %v948, 0.0
    %v967 = vsel %vm957, %v956, 0.0
    %968 = vrot.lane.b32.xlu0 %v696, 60
    %v969 = vpop.permute.xlu0 %968
    %970 = vrot.lane.b32.xlu0 %v697, 60
    %v971 = vpop.permute.xlu0 %970
    %972 = vrot.lane.b32.xlu0 %v698, 60
    %v973 = vpop.permute.xlu0 %972
    %974 = vrot.lane.b32.xlu0 %v699, 60
    %v975 = vpop.permute.xlu0 %974
    %976 = vrot.lane.b32.xlu0 %v700, 60
    %v977 = vpop.permute.xlu0 %976
    %978 = vrot.lane.b32.xlu0 %v701, 60
    %v979 = vpop.permute.xlu0 %978
    %980 = vrot.lane.b32.xlu0 %v702, 60
    %v981 = vpop.permute.xlu0 %980
    %982 = vrot.lane.b32.xlu0 %v703, 60
    %v983 = vpop.permute.xlu0 %982
    %vm984 = vcmask 490496
    %v985 = vsel %vm984, %v969, %v971
    %v986 = vsel %vm984, %v971, %v973
    %v987 = vsel %vm984, %v973, %v975
    %v988 = vsel %vm984, %v977, %v979
    %v989 = vsel %vm984, %v979, %v981
    %v990 = vsel %vm984, %v981, %v983
    %v993 = vsel %vm984, %v975, 0.0
    %v994 = vsel %vm984, %v983, 0.0
    %995 = vrot.lane.b32.xlu0 %v696, 58
    %v996 = vpop.permute.xlu0 %995
    %997 = vrot.lane.b32.xlu0 %v697, 58
    %v998 = vpop.permute.xlu0 %997
    %999 = vrot.lane.b32.xlu0 %v698, 58
    %v1000 = vpop.permute.xlu0 %999
    %1001 = vrot.lane.b32.xlu0 %v699, 58
    %v1002 = vpop.permute.xlu0 %1001
    %1003 = vrot.lane.b32.xlu0 %v700, 58
    %v1004 = vpop.permute.xlu0 %1003
    %1005 = vrot.lane.b32.xlu0 %v701, 58
    %v1006 = vpop.permute.xlu0 %1005
    %1007 = vrot.lane.b32.xlu0 %v702, 58
    %v1008 = vpop.permute.xlu0 %1007
    %1009 = vrot.lane.b32.xlu0 %v703, 58
    %v1010 = vpop.permute.xlu0 %1009
    %vm1011 = vcmask 474112
    %v1012 = vsel %vm1011, %v996, %v998
    %v1013 = vsel %vm1011, %v998, %v1000
    %v1014 = vsel %vm1011, %v1000, %v1002
    %v1015 = vsel %vm1011, %v1004, %v1006
    %v1016 = vsel %vm1011, %v1006, %v1008
    %v1017 = vsel %vm1011, %v1008, %v1010
    %v1020 = vsel %vm1011, %v1002, 0.0
    %v1021 = vsel %vm1011, %v1010, 0.0
    %1022 = vrot.lane.b32.xlu0 %v696, 32
    %v1023 = vpop.permute.xlu0 %1022
    %1024 = vrot.lane.b32.xlu0 %v697, 32
    %v1025 = vpop.permute.xlu0 %1024
    %1026 = vrot.lane.b32.xlu0 %v698, 32
    %v1027 = vpop.permute.xlu0 %1026
    %1028 = vrot.lane.b32.xlu0 %v699, 32
    %v1029 = vpop.permute.xlu0 %1028
    %1030 = vrot.lane.b32.xlu0 %v700, 32
    %v1031 = vpop.permute.xlu0 %1030
    %1032 = vrot.lane.b32.xlu0 %v701, 32
    %v1033 = vpop.permute.xlu0 %1032
    %1034 = vrot.lane.b32.xlu0 %v702, 32
    %v1035 = vpop.permute.xlu0 %1034
    %1036 = vrot.lane.b32.xlu0 %v703, 32
    %v1037 = vpop.permute.xlu0 %1036
    %vm1038 = vcmask 261120
    %v1039 = vsel %vm1038, %v1023, %v1025
    %v1040 = vsel %vm1038, %v1025, %v1027
    %v1041 = vsel %vm1038, %v1027, %v1029
    %v1042 = vsel %vm1038, %v1031, %v1033
    %v1043 = vsel %vm1038, %v1033, %v1035
    %v1044 = vsel %vm1038, %v1035, %v1037
    %v1053 = vsel %vm1038, %v1029, 0.0
    %v1054 = vsel %vm1038, %v1037, 0.0
    %1055 = vrot.lane.b32.xlu0 %v696, 30
    %v1056 = vpop.permute.xlu0 %1055
    %1057 = vrot.lane.b32.xlu0 %v697, 30
    %v1058 = vpop.permute.xlu0 %1057
    %1059 = vrot.lane.b32.xlu0 %v698, 30
    %v1060 = vpop.permute.xlu0 %1059
    %1061 = vrot.lane.b32.xlu0 %v699, 30
    %v1062 = vpop.permute.xlu0 %1061
    %1063 = vrot.lane.b32.xlu0 %v700, 30
    %v1064 = vpop.permute.xlu0 %1063
    %1065 = vrot.lane.b32.xlu0 %v701, 30
    %v1066 = vpop.permute.xlu0 %1065
    %1067 = vrot.lane.b32.xlu0 %v702, 30
    %v1068 = vpop.permute.xlu0 %1067
    %1069 = vrot.lane.b32.xlu0 %v703, 30
    %v1070 = vpop.permute.xlu0 %1069
    %vm1071 = vcmask 244736
    %v1072 = vsel %vm1071, %v1056, %v1058
    %v1073 = vsel %vm1071, %v1058, %v1060
    %v1074 = vsel %vm1071, %v1060, %v1062
    %v1075 = vsel %vm1071, %v1064, %v1066
    %v1076 = vsel %vm1071, %v1066, %v1068
    %v1077 = vsel %vm1071, %v1068, %v1070
    %v1080 = vsel %vm1071, %v1062, 0.0
    %v1081 = vsel %vm1071, %v1070, 0.0
    %1082 = vrot.lane.b32.xlu0 %v696, 28
    %v1083 = vpop.permute.xlu0 %1082
    %1084 = vrot.lane.b32.xlu0 %v697, 28
    %v1085 = vpop.permute.xlu0 %1084
    %1086 = vrot.lane.b32.xlu0 %v698, 28
    %v1087 = vpop.permute.xlu0 %1086
    %1088 = vrot.lane.b32.xlu0 %v699, 28
    %v1089 = vpop.permute.xlu0 %1088
    %1090 = vrot.lane.b32.xlu0 %v700, 28
    %v1091 = vpop.permute.xlu0 %1090
    %1092 = vrot.lane.b32.xlu0 %v701, 28
    %v1093 = vpop.permute.xlu0 %1092
    %1094 = vrot.lane.b32.xlu0 %v702, 28
    %v1095 = vpop.permute.xlu0 %1094
    %1096 = vrot.lane.b32.xlu0 %v703, 28
    %v1097 = vpop.permute.xlu0 %1096
    %vm1098 = vcmask 228352
    %v1099 = vsel %vm1098, %v1083, %v1085
    %v1100 = vsel %vm1098, %v1085, %v1087
    %v1101 = vsel %vm1098, %v1087, %v1089
    %v1102 = vsel %vm1098, %v1091, %v1093
    %v1103 = vsel %vm1098, %v1093, %v1095
    %v1104 = vsel %vm1098, %v1095, %v1097
    %v1107 = vsel %vm1098, %v1089, 0.0
    %v1108 = vsel %vm1098, %v1097, 0.0
    %1109 = vrot.lane.b32.xlu0 %v696, 26
    %v1110 = vpop.permute.xlu0 %1109
    %1111 = vrot.lane.b32.xlu0 %v697, 26
    %v1112 = vpop.permute.xlu0 %1111
    %1113 = vrot.lane.b32.xlu0 %v698, 26
    %v1114 = vpop.permute.xlu0 %1113
    %1115 = vrot.lane.b32.xlu0 %v699, 26
    %v1116 = vpop.permute.xlu0 %1115
    %1117 = vrot.lane.b32.xlu0 %v700, 26
    %v1118 = vpop.permute.xlu0 %1117
    %1119 = vrot.lane.b32.xlu0 %v701, 26
    %v1120 = vpop.permute.xlu0 %1119
    %1121 = vrot.lane.b32.xlu0 %v702, 26
    %v1122 = vpop.permute.xlu0 %1121
    %1123 = vrot.lane.b32.xlu0 %v703, 26
    %v1124 = vpop.permute.xlu0 %1123
    %vm1125 = vcmask 211968
    %v1126 = vsel %vm1125, %v1110, %v1112
    %v1127 = vsel %vm1125, %v1112, %v1114
    %v1128 = vsel %vm1125, %v1114, %v1116
    %v1129 = vsel %vm1125, %v1118, %v1120
    %v1130 = vsel %vm1125, %v1120, %v1122
    %v1131 = vsel %vm1125, %v1122, %v1124
    %v1134 = vsel %vm1125, %v1116, 0.0
    %v1135 = vsel %vm1125, %v1124, 0.0
    %v1138 = vrot.slane %v732, 6
    %v1139 = vrot.slane %v733, 6
    %v1140 = vrot.slane %v734, 6
    %v1141 = vrot.slane %v740, 6
    %v1142 = vrot.slane %v735, 6
    %v1143 = vsel %vm393, %v1138, %v1142
    %v1144 = vrot.slane %v736, 6
    %v1145 = vsel %vm393, %v1139, %v1144
    %v1146 = vrot.slane %v737, 6
    %v1147 = vsel %vm393, %v1140, %v1146
    %v1148 = vrot.slane %v741, 6
    %v1149 = vsel %vm393, %v1141, %v1148
    %v1160 = vrot.slane %v759, 4
    %v1161 = vrot.slane %v760, 4
    %v1162 = vrot.slane %v761, 4
    %v1163 = vrot.slane %v767, 4
    %v1164 = vrot.slane %v762, 4
    %v1165 = vsel %vm383, %v1160, %v1164
    %v1166 = vrot.slane %v763, 4
    %v1167 = vsel %vm383, %v1161, %v1166
    %v1168 = vrot.slane %v764, 4
    %v1169 = vsel %vm383, %v1162, %v1168
    %v1170 = vrot.slane %v768, 4
    %v1171 = vsel %vm383, %v1163, %v1170
    %v1182 = vrot.slane %v786, 2
    %v1183 = vrot.slane %v787, 2
    %v1184 = vrot.slane %v788, 2
    %v1185 = vrot.slane %v794, 2
    %v1186 = vrot.slane %v789, 2
    %v1187 = vsel %vm373, %v1182, %v1186
    %v1188 = vrot.slane %v790, 2
    %v1189 = vsel %vm373, %v1183, %v1188
    %v1190 = vrot.slane %v791, 2
    %v1191 = vsel %vm373, %v1184, %v1190
    %v1192 = vrot.slane %v795, 2
    %v1193 = vsel %vm373, %v1185, %v1192
    %v1204 = vrot.slane %v844, 6
    %v1205 = vrot.slane %v845, 6
    %v1206 = vrot.slane %v846, 6
    %v1207 = vrot.slane %v852, 6
    %v1208 = vrot.slane %v847, 6
    %v1209 = vsel %vm393, %v1204, %v1208
    %v1210 = vrot.slane %v848, 6
    %v1211 = vsel %vm393, %v1205, %v1210
    %v1212 = vrot.slane %v849, 6
    %v1213 = vsel %vm393, %v1206, %v1212
    %v1214 = vrot.slane %v853, 6
    %v1215 = vsel %vm393, %v1207, %v1214
    %v1226 = vrot.slane %v871, 4
    %v1227 = vrot.slane %v872, 4
    %v1228 = vrot.slane %v873, 4
    %v1229 = vrot.slane %v879, 4
    %v1230 = vrot.slane %v874, 4
    %v1231 = vsel %vm383, %v1226, %v1230
    %v1232 = vrot.slane %v875, 4
    %v1233 = vsel %vm383, %v1227, %v1232
    %v1234 = vrot.slane %v876, 4
    %v1235 = vsel %vm383, %v1228, %v1234
    %v1236 = vrot.slane %v880, 4
    %v1237 = vsel %vm383, %v1229, %v1236
    %v1248 = vrot.slane %v898, 2
    %v1249 = vrot.slane %v899, 2
    %v1250 = vrot.slane %v900, 2
    %v1251 = vrot.slane %v906, 2
    %v1252 = vrot.slane %v901, 2
    %v1253 = vsel %vm373, %v1248, %v1252
    %v1254 = vrot.slane %v902, 2
    %v1255 = vsel %vm373, %v1249, %v1254
    %v1256 = vrot.slane %v903, 2
    %v1257 = vsel %vm373, %v1250, %v1256
    %v1258 = vrot.slane %v907, 2
    %v1259 = vsel %vm373, %v1251, %v1258
    %v1270 = vrot.slane %v958, 6
    %v1271 = vrot.slane %v959, 6
    %v1272 = vrot.slane %v960, 6
    %v1273 = vrot.slane %v966, 6
    %v1274 = vrot.slane %v961, 6
    %v1275 = vsel %vm393, %v1270, %v1274
    %v1276 = vrot.slane %v962, 6
    %v1277 = vsel %vm393, %v1271, %v1276
    %v1278 = vrot.slane %v963, 6
    %v1279 = vsel %vm393, %v1272, %v1278
    %v1280 = vrot.slane %v967, 6
    %v1281 = vsel %vm393, %v1273, %v1280
    %v1292 = vrot.slane %v985, 4
    %v1293 = vrot.slane %v986, 4
    %v1294 = vrot.slane %v987, 4
    %v1295 = vrot.slane %v993, 4
    %v1296 = vrot.slane %v988, 4
    %v1297 = vsel %vm383, %v1292, %v1296
    %v1298 = vrot.slane %v989, 4
    %v1299 = vsel %vm383, %v1293, %v1298
    %v1300 = vrot.slane %v990, 4
    %v1301 = vsel %vm383, %v1294, %v1300
    %v1302 = vrot.slane %v994, 4
    %v1303 = vsel %vm383, %v1295, %v1302
    %v1314 = vrot.slane %v1012, 2
    %v1315 = vrot.slane %v1013, 2
    %v1316 = vrot.slane %v1014, 2
    %v1317 = vrot.slane %v1020, 2
    %v1318 = vrot.slane %v1015, 2
    %v1319 = vsel %vm373, %v1314, %v1318
    %v1320 = vrot.slane %v1016, 2
    %v1321 = vsel %vm373, %v1315, %v1320
    %v1322 = vrot.slane %v1017, 2
    %v1323 = vsel %vm373, %v1316, %v1322
    %v1324 = vrot.slane %v1021, 2
    %v1325 = vsel %vm373, %v1317, %v1324
    %v1336 = vrot.slane %v1072, 6
    %v1337 = vrot.slane %v1073, 6
    %v1338 = vrot.slane %v1074, 6
    %v1339 = vrot.slane %v1080, 6
    %v1340 = vrot.slane %v1075, 6
    %v1341 = vsel %vm393, %v1336, %v1340
    %v1342 = vrot.slane %v1076, 6
    %v1343 = vsel %vm393, %v1337, %v1342
    %v1344 = vrot.slane %v1077, 6
    %v1345 = vsel %vm393, %v1338, %v1344
    %v1346 = vrot.slane %v1081, 6
    %v1347 = vsel %vm393, %v1339, %v1346
    %v1358 = vrot.slane %v1099, 4
    %v1359 = vrot.slane %v1100, 4
    %v1360 = vrot.slane %v1101, 4
    %v1361 = vrot.slane %v1107, 4
    %v1362 = vrot.slane %v1102, 4
    %v1363 = vsel %vm383, %v1358, %v1362
    %v1364 = vrot.slane %v1103, 4
    %v1365 = vsel %vm383, %v1359, %v1364
    %v1366 = vrot.slane %v1104, 4
    %v1367 = vsel %vm383, %v1360, %v1366
    %v1368 = vrot.slane %v1108, 4
    %v1369 = vsel %vm383, %v1361, %v1368
    %v1380 = vrot.slane %v1126, 2
    %v1381 = vrot.slane %v1127, 2
    %v1382 = vrot.slane %v1128, 2
    %v1383 = vrot.slane %v1134, 2
    %v1384 = vrot.slane %v1129, 2
    %v1385 = vsel %vm373, %v1380, %v1384
    %v1386 = vrot.slane %v1130, 2
    %v1387 = vsel %vm373, %v1381, %v1386
    %v1388 = vrot.slane %v1131, 2
    %v1389 = vsel %vm373, %v1382, %v1388
    %v1390 = vrot.slane %v1135, 2
    %v1391 = vsel %vm373, %v1383, %v1390
    %v1400 = vsel %vm393, %v700, %v1138
    %v1401 = vsel %vm393, %v701, %v1139
    %v1402 = vsel %vm393, %v702, %v1140
    %v1403 = vsel %vm393, %v703, %v1141
    %v1404 = vsel %vm383, %v1143, %v1160
    %v1405 = vsel %vm383, %v1145, %v1161
    %v1406 = vsel %vm383, %v1147, %v1162
    %v1407 = vsel %vm383, %v1149, %v1163
    %v1408 = vsel %vm373, %v1165, %v1182
    %v1409 = vsel %vm373, %v1167, %v1183
    %v1410 = vsel %vm373, %v1169, %v1184
    %v1411 = vsel %vm373, %v1171, %v1185
    %v1412 = vsel %vm393, %v815, %v1204
    %v1413 = vsel %vm393, %v816, %v1205
    %v1414 = vsel %vm393, %v817, %v1206
    %v1415 = vsel %vm393, %v827, %v1207
    %v1416 = vsel %vm383, %v1209, %v1226
    %v1417 = vsel %vm383, %v1211, %v1227
    %v1418 = vsel %vm383, %v1213, %v1228
    %v1419 = vsel %vm383, %v1215, %v1229
    %v1420 = vsel %vm373, %v1231, %v1248
    %v1421 = vsel %vm373, %v1233, %v1249
    %v1422 = vsel %vm373, %v1235, %v1250
    %v1423 = vsel %vm373, %v1237, %v1251
    %v1424 = vsel %vm393, %v928, %v1270
    %v1425 = vsel %vm393, %v929, %v1271
    %v1426 = vsel %vm393, %v930, %v1272
    %v1427 = vsel %vm393, %v940, %v1273
    %v1428 = vsel %vm383, %v1275, %v1292
    %v1429 = vsel %vm383, %v1277, %v1293
    %v1430 = vsel %vm383, %v1279, %v1294
    %v1431 = vsel %vm383, %v1281, %v1295
    %v1432 = vsel %vm373, %v1297, %v1314
    %v1433 = vsel %vm373, %v1299, %v1315
    %v1434 = vsel %vm373, %v1301, %v1316
    %v1435 = vsel %vm373, %v1303, %v1317
    %v1436 = vsel %vm393, %v1042, %v1336
    %v1437 = vsel %vm393, %v1043, %v1337
    %v1438 = vsel %vm393, %v1044, %v1338
    %v1439 = vsel %vm393, %v1054, %v1339
    %v1440 = vsel %vm383, %v1341, %v1358
    %v1441 = vsel %vm383, %v1343, %v1359
    %v1442 = vsel %vm383, %v1345, %v1360
    %v1443 = vsel %vm383, %v1347, %v1361
    %v1444 = vsel %vm373, %v1363, %v1380
    %v1445 = vsel %vm373, %v1365, %v1381
    %v1446 = vsel %vm373, %v1367, %v1382
    %v1447 = vsel %vm373, %v1369, %v1383
    %1449 = vset.pattern.permute.xlu0 32
    %1450 = vperm.xlu0 %1449, %v705
    %v1451 = vpop.permute.xlu0 %1450
    %1453 = vset.pattern.permute.xlu0 32
    %1454 = vperm.xlu0 %1453, %v707
    %v1455 = vpop.permute.xlu0 %1454
    %v1458 = vrot.slane %v704, 2
    %v1459 = vrot.slane %v706, 2
    %v1460 = vsel %vm373, %v1458, %v1459
    %v1461 = vrot.slane %v705, 2
    %v1462 = vrot.slane %v707, 2
    %v1463 = vsel %vm373, %v1461, %v1462
    %v1465 = vrot.slane %v1451, 2
    %v1466 = vrot.slane %v1455, 2
    %v1467 = vsel %vm373, %v1465, %v1466
    %v1469 = vsel %vm1038, %v1463, 0
    %1471 = vmatprep.subr.mxu0 %v697
    %1472 = vmatpush1.msra.mxu0 %v696
    %1473 = vmatprep.subr.mxu0 %v1401
    %1474 = vmatpush1.msra.mxu0 %v1400
    %1475 = vmatprep.subr.mxu0 %v1405
    %1476 = vmatpush1.msra.mxu0 %v1404
    %1477 = vmatprep.subr.mxu0 %v1409
    %1478 = vmatpush1.msra.mxu0 %v1408
    %1479 = vmatprep.subr.mxu0 %v1189
    %1480 = vmatpush1.msra.mxu0 %v1187
    %1481 = vmatprep.subr.mxu0 %v813
    %1482 = vmatpush1.msra.mxu0 %v812
    %1483 = vmatprep.subr.mxu0 %v1413
    %1484 = vmatpush1.msra.mxu0 %v1412
    %1485 = vmatprep.subr.mxu0 %v1417
    %1486 = vmatpush1.msra.mxu0 %v1416
    %1487 = vmatprep.subr.mxu0 %v1421
    %1488 = vmatpush1.msra.mxu0 %v1420
    %1489 = vmatprep.subr.mxu0 %v1255
    %1490 = vmatpush1.msra.mxu0 %v1253
    %1491 = vmatprep.subr.mxu0 %v926
    %1492 = vmatpush1.msra.mxu0 %v925
    %1493 = vmatprep.subr.mxu0 %v1425
    %1494 = vmatpush1.msra.mxu0 %v1424
    %1495 = vmatprep.subr.mxu0 %v1429
    %1496 = vmatpush1.msra.mxu0 %v1428
    %1497 = vmatprep.subr.mxu0 %v1433
    %1498 = vmatpush1.msra.mxu0 %v1432
    %1499 = vmatprep.subr.mxu0 %v1321
    %1500 = vmatpush1.msra.mxu0 %v1319
    %1501 = vmatprep.subr.mxu0 %v1040
    %1502 = vmatpush1.msra.mxu0 %v1039
    %1503 = vmatprep.subr.mxu0 %v1437
    %1504 = vmatpush1.msra.mxu0 %v1436
    %1505 = vmatprep.subr.mxu0 %v1441
    %1506 = vmatpush1.msra.mxu0 %v1440
    %1507 = vmatprep.subr.mxu0 %v1445
    %1508 = vmatpush1.msra.mxu0 %v1444
    %1509 = vmatprep.subr.mxu0 %v1387
    %1510 = vmatpush1.msra.mxu0 %v1385
    %1511 = vmatprep.subr.mxu0 0.0
    %1512 = vmatpush1.msra.mxu0 0.0
    %1513 = vmatprep.subr.mxu0 0.0
    %1514 = vmatpush1.msra.mxu0 0.0
    %1515 = vmatprep.subr.mxu0 0.0
    %1516 = vmatpush1.msra.mxu0 0.0
    %1517 = vmatprep.subr.mxu0 0.0
    %1518 = vmatpush1.msra.mxu0 0.0
    %1519 = vmatprep.subr.mxu0 0.0
    %1520 = vmatpush1.msra.mxu0 0.0
    %1521 = vmatprep.subr.mxu0 0.0
    %1522 = vmatpush1.msra.mxu0 0.0
    %1523 = vmatprep.subr.mxu0 0.0
    %1524 = vmatpush1.msra.mxu0 0.0
    %1525 = vmatprep.subr.mxu0 0.0
    %1526 = vmatpush1.msra.mxu0 0.0
    %1527 = vmatprep.subr.mxu0 0.0
    %1528 = vmatpush1.msra.mxu0 0.0
    %1529 = vmatprep.subr.mxu0 0.0
    %1530 = vmatpush1.msra.mxu0 0.0
    %1531 = vmatprep.subr.mxu0 0.0
    %1532 = vmatpush1.msra.mxu0 0.0
    %1533 = vmatprep.subr.mxu0 0.0
    %1534 = vmatpush1.msra.mxu0 0.0
    %1535 = vmatprep.mubr.f32.mxu0 %v1469
    %1536 = vmatmul.mubr.f32.gmra.mrb[0].mxu0 %v1460
    %v1537 = vpop.f32.mrb[0].mxu0
    %v1538 = vadd.f32 %v1467, %v1537
    %v1539 = vpop.f32.mrb[0].mxu0
    %v1540 = vadd.f32 %v1467, %v1539
    %1541 = vdwg.mxu0
    %1542 = vmatprep.subr.mxu0 %v699
    %1543 = vmatpush1.msra.mxu0 %v698
    %1544 = vmatprep.subr.mxu0 %v1403
    %1545 = vmatpush1.msra.mxu0 %v1402
    %1546 = vmatprep.subr.mxu0 %v1407
    %1547 = vmatpush1.msra.mxu0 %v1406
    %1548 = vmatprep.subr.mxu0 %v1411
    %1549 = vmatpush1.msra.mxu0 %v1410
    %1550 = vmatprep.subr.mxu0 %v1193
    %1551 = vmatpush1.msra.mxu0 %v1191
    %1552 = vmatprep.subr.mxu0 %v826
    %1553 = vmatpush1.msra.mxu0 %v814
    %1554 = vmatprep.subr.mxu0 %v1415
    %1555 = vmatpush1.msra.mxu0 %v1414
    %1556 = vmatprep.subr.mxu0 %v1419
    %1557 = vmatpush1.msra.mxu0 %v1418
    %1558 = vmatprep.subr.mxu0 %v1423
    %1559 = vmatpush1.msra.mxu0 %v1422
    %1560 = vmatprep.subr.mxu0 %v1259
    %1561 = vmatpush1.msra.mxu0 %v1257
    %1562 = vmatprep.subr.mxu0 %v939
    %1563 = vmatpush1.msra.mxu0 %v927
    %1564 = vmatprep.subr.mxu0 %v1427
    %1565 = vmatpush1.msra.mxu0 %v1426
    %1566 = vmatprep.subr.mxu0 %v1431
    %1567 = vmatpush1.msra.mxu0 %v1430
    %1568 = vmatprep.subr.mxu0 %v1435
    %1569 = vmatpush1.msra.mxu0 %v1434
    %1570 = vmatprep.subr.mxu0 %v1325
    %1571 = vmatpush1.msra.mxu0 %v1323
    %1572 = vmatprep.subr.mxu0 %v1053
    %1573 = vmatpush1.msra.mxu0 %v1041
    %1574 = vmatprep.subr.mxu0 %v1439
    %1575 = vmatpush1.msra.mxu0 %v1438
    %1576 = vmatprep.subr.mxu0 %v1443
    %1577 = vmatpush1.msra.mxu0 %v1442
    %1578 = vmatprep.subr.mxu0 %v1447
    %1579 = vmatpush1.msra.mxu0 %v1446
    %1580 = vmatprep.subr.mxu0 %v1391
    %1581 = vmatpush1.msra.mxu0 %v1389
    %1582 = vmatprep.subr.mxu0 0.0
    %1583 = vmatpush1.msra.mxu0 0.0
    %1584 = vmatprep.subr.mxu0 0.0
    %1585 = vmatpush1.msra.mxu0 0.0
    %1586 = vmatprep.subr.mxu0 0.0
    %1587 = vmatpush1.msra.mxu0 0.0
    %1588 = vmatprep.subr.mxu0 0.0
    %1589 = vmatpush1.msra.mxu0 0.0
    %1590 = vmatprep.subr.mxu0 0.0
    %1591 = vmatpush1.msra.mxu0 0.0
    %1592 = vmatprep.subr.mxu0 0.0
    %1593 = vmatpush1.msra.mxu0 0.0
    %1594 = vmatprep.subr.mxu0 0.0
    %1595 = vmatpush1.msra.mxu0 0.0
    %1596 = vmatprep.subr.mxu0 0.0
    %1597 = vmatpush1.msra.mxu0 0.0
    %1598 = vmatprep.subr.mxu0 0.0
    %1599 = vmatpush1.msra.mxu0 0.0
    %1600 = vmatprep.subr.mxu0 0.0
    %1601 = vmatpush1.msra.mxu0 0.0
    %1602 = vmatprep.subr.mxu0 0.0
    %1603 = vmatpush1.msra.mxu0 0.0
    %1604 = vmatprep.subr.mxu0 0.0
    %1605 = vmatpush1.msra.mxu0 0.0
    %1606 = vmatprep.mubr.f32.mxu0 %v1469
    %1607 = vmatmul.mubr.f32.gmra.mrb[0].mxu0 %v1460
    %v1608 = vpop.f32.mrb[0].mxu0
    %v1609 = vadd.f32 %v1467, %v1608
    %v1610 = vpop.f32.mrb[0].mxu0
    %v1611 = vadd.f32 %v1467, %v1610
    %1612 = vdwg.mxu0
    %v1613 = vmax.f32 %v1538, 0.0
    %v1614 = vmax.f32 %v1540, 0.0
    %v1615 = vmax.f32 %v1609, 0.0
    %v1616 = vmax.f32 %v1611, 0.0
    %1621 = vrot.lane.b32.xlu0 %v1613, 126
    %v1622 = vpop.permute.xlu0 %1621
    %1623 = vrot.lane.b32.xlu0 %v1614, 126
    %v1624 = vpop.permute.xlu0 %1623
    %1625 = vrot.lane.b32.xlu0 %v1615, 126
    %v1626 = vpop.permute.xlu0 %1625
    %1627 = vrot.lane.b32.xlu0 %v1616, 126
    %v1628 = vpop.permute.xlu0 %1627
    %v1629 = vsel %vm51, %v1622, %v1624
    %v1630 = vsel %vm51, %v1624, %v1626
    %v1631 = vsel %vm51, %v1626, %v1628
    %v1636 = vsel %vm51, %v1628, 0.0
    %v1637 = vmax.f32 %v1613, %v1629
    %v1638 = vmax.f32 %v1614, %v1630
    %v1639 = vmax.f32 %v1615, %v1631
    %v1640 = vmax.f32 %v1616, %v1636
    %1645 = vrot.lane.b32.xlu0 %v1637, 96
    %v1646 = vpop.permute.xlu0 %1645
    %1647 = vrot.lane.b32.xlu0 %v1638, 96
    %v1648 = vpop.permute.xlu0 %1647
    %1649 = vrot.lane.b32.xlu0 %v1639, 96
    %v1650 = vpop.permute.xlu0 %1649
    %1651 = vrot.lane.b32.xlu0 %v1640, 96
    %v1652 = vpop.permute.xlu0 %1651
    %v1653 = vsel %vm135, %v1646, %v1648
    %v1654 = vsel %vm135, %v1650, %v1652
    %v1657 = vmax.f32 %v1637, %v1653
    %v1658 = vmax.f32 %v1639, %v1654
    %1660 = vrot.lane.b32.xlu0 %v1658, 1
    %v1661 = vpop.permute.xlu0 %1660
    %vm1663 = vcmask 7168
    %v1664 = vsel %vm1663, %v1657, %v1661
    %1665 = vxpose.xlu0.b32.start [1/16] %v1664, 128
    %1666 = vxpose.xlu0.b32.cont [2/16] 0.0, 128
    %1667 = vxpose.xlu0.b32.cont [3/16] 0.0, 128
    %1668 = vxpose.xlu0.b32.cont [4/16] 0.0, 128
    %1669 = vxpose.xlu0.b32.cont [5/16] 0.0, 128
    %1670 = vxpose.xlu0.b32.cont [6/16] 0.0, 128
    %1671 = vxpose.xlu0.b32.cont [7/16] 0.0, 128
    %1672 = vxpose.xlu0.b32.cont [8/16] 0.0, 128
    %1673 = vxpose.xlu0.b32.cont [9/16] 0.0, 128
    %1674 = vxpose.xlu0.b32.cont [10/16] 0.0, 128
    %1675 = vxpose.xlu0.b32.cont [11/16] 0.0, 128
    %1676 = vxpose.xlu0.b32.cont [12/16] 0.0, 128
    %1677 = vxpose.xlu0.b32.cont [13/16] 0.0, 128
    %1678 = vxpose.xlu0.b32.cont [14/16] 0.0, 128
    %1679 = vxpose.xlu0.b32.cont [15/16] 0.0, 128
    %1680 = vxpose.xlu0.b32.end [16/16] 0.0, 128
    %v1681 = vpop.trf.xlu0
    %v1682 = vpop.trf.xlu0
    %v1683 = vpop.trf.xlu0
    %v1684 = vpop.trf.xlu0
    %v1685 = vpop.trf.xlu0
    %v1686 = vpop.trf.xlu0
    %v1687 = vpop.trf.xlu0
    %v1688 = vpop.trf.xlu0
    %v1689 = vpop.trf.xlu0
    %v1690 = vpop.trf.xlu0
    %v1691 = vpop.trf.xlu0
    %v1692 = vpop.trf.xlu0
    %v1693 = vpop.trf.xlu0
    %v1694 = vpop.trf.xlu0
    %v1695 = vpop.trf.xlu0
    %v1696 = vpop.trf.xlu0
    %v1697 = vld [vmem:[%s2] sm:$0xff]
    %v1698 = vld [vmem:[%s2 + $0x8] sm:$0xff]
    %s1699 = scalar_lea.vmem %s2, 16
    %v1700 = vld [vmem:[%s1699] ss:$8 sm:$0x3]
    %v1702 = vlaneseq
    %v1703 = vshrl.u32 %v1702, 7
    %v1704 = vsub.s32 0, %v1703
    %v1705 = vrot.slane %v1700, %v1704
    %v1706 = vlaneseq
    %v1707 = vshrl.u32 %v1706, 7
    %v1708 = vsub.s32 1, %v1707
    %v1709 = vrot.slane %v1700, %v1708
    %vm1712 = vcmask 64512
    %v1714 = vsel %vm1712, %v1681, 0
    %1716 = vmatprep.subr.mxu0 %v1698
    %1717 = vmatpush1.msra.mxu0 %v1697
    %1718 = vmatprep.subr.mxu0 0.0
    %1719 = vmatpush1.msra.mxu0 0.0
    %1720 = vmatprep.subr.mxu0 0.0
    %1721 = vmatpush1.msra.mxu0 0.0
    %1722 = vmatprep.subr.mxu0 0.0
    %1723 = vmatpush1.msra.mxu0 0.0
    %1724 = vmatprep.subr.mxu0 0.0
    %1725 = vmatpush1.msra.mxu0 0.0
    %1726 = vmatprep.subr.mxu0 0.0
    %1727 = vmatpush1.msra.mxu0 0.0
    %1728 = vmatprep.subr.mxu0 0.0
    %1729 = vmatpush1.msra.mxu0 0.0
    %1730 = vmatprep.subr.mxu0 0.0
    %1731 = vmatpush1.msra.mxu0 0.0
    %1732 = vmatprep.subr.mxu0 0.0
    %1733 = vmatpush1.msra.mxu0 0.0
    %1734 = vmatprep.subr.mxu0 0.0
    %1735 = vmatpush1.msra.mxu0 0.0
    %1736 = vmatprep.subr.mxu0 0.0
    %1737 = vmatpush1.msra.mxu0 0.0
    %1738 = vmatprep.subr.mxu0 0.0
    %1739 = vmatpush1.msra.mxu0 0.0
    %1740 = vmatprep.subr.mxu0 0.0
    %1741 = vmatpush1.msra.mxu0 0.0
    %1742 = vmatprep.subr.mxu0 0.0
    %1743 = vmatpush1.msra.mxu0 0.0
    %1744 = vmatprep.subr.mxu0 0.0
    %1745 = vmatpush1.msra.mxu0 0.0
    %1746 = vmatprep.subr.mxu0 0.0
    %1747 = vmatpush1.msra.mxu0 0.0
    %1748 = vmatprep.subr.mxu0 0.0
    %1749 = vmatpush1.msra.mxu0 0.0
    %1750 = vmatprep.subr.mxu0 0.0
    %1751 = vmatpush1.msra.mxu0 0.0
    %1752 = vmatprep.subr.mxu0 0.0
    %1753 = vmatpush1.msra.mxu0 0.0
    %1754 = vmatprep.subr.mxu0 0.0
    %1755 = vmatpush1.msra.mxu0 0.0
    %1756 = vmatprep.subr.mxu0 0.0
    %1757 = vmatpush1.msra.mxu0 0.0
    %1758 = vmatprep.subr.mxu0 0.0
    %1759 = vmatpush1.msra.mxu0 0.0
    %1760 = vmatprep.subr.mxu0 0.0
    %1761 = vmatpush1.msra.mxu0 0.0
    %1762 = vmatprep.subr.mxu0 0.0
    %1763 = vmatpush1.msra.mxu0 0.0
    %1764 = vmatprep.subr.mxu0 0.0
    %1765 = vmatpush1.msra.mxu0 0.0
    %1766 = vmatprep.subr.mxu0 0.0
    %1767 = vmatpush1.msra.mxu0 0.0
    %1768 = vmatprep.subr.mxu0 0.0
    %1769 = vmatpush1.msra.mxu0 0.0
    %1770 = vmatprep.subr.mxu0 0.0
    %1771 = vmatpush1.msra.mxu0 0.0
    %1772 = vmatprep.subr.mxu0 0.0
    %1773 = vmatpush1.msra.mxu0 0.0
    %1774 = vmatprep.subr.mxu0 0.0
    %1775 = vmatpush1.msra.mxu0 0.0
    %1776 = vmatprep.subr.mxu0 0.0
    %1777 = vmatpush1.msra.mxu0 0.0
    %1778 = vmatprep.subr.mxu0 0.0
    %1779 = vmatpush1.msra.mxu0 0.0
    %1780 = vmatprep.mubr.f32.mxu0 0.0
    %1781 = vmatmul.mubr.f32.gmra.mrb[0].mxu0 %v1714
    %v1782 = vpop.f32.mrb[0].mxu0
    %v1783 = vadd.f32 %v1705, %v1782
    %v1784 = vpop.f32.mrb[0].mxu0
    %v1785 = vadd.f32 %v1709, %v1784
    %1786 = vdwg.mxu0
    %v1787 = vmax.f32 %v1783, 0.0
    %v1788 = vmax.f32 %v1785, 0.0
    %v1789 = vld [vmem:[%s3] sm:$0xff]
    %v1790 = vld [vmem:[%s3 + $0x8] sm:$0xff]
    %v1791 = vld [vmem:[%s3 + $0x10] sm:$0xff]
    %v1792 = vld [vmem:[%s3 + $0x18] sm:$0xff]
    %v1793 = vld [vmem:[%s3 + $0x20] sm:$0xff]
    %v1794 = vld [vmem:[%s3 + $0x28] sm:$0xff]
    %v1795 = vld [vmem:[%s3 + $0x30] sm:$0xff]
    %v1796 = vld [vmem:[%s3 + $0x38] sm:$0xff]
    %v1797 = vld [vmem:[%s3 + $0x40] sm:$0xff]
    %v1798 = vld [vmem:[%s3 + $0x48] sm:$0xff]
    %v1799 = vld [vmem:[%s3 + $0x50] sm:$0xff]
    %v1800 = vld [vmem:[%s3 + $0x58] sm:$0xff]
    %v1801 = vld [vmem:[%s3 + $0x60] sm:$0xff]
    %v1802 = vld [vmem:[%s3 + $0x68] sm:$0xff]
    %v1803 = vld [vmem:[%s3 + $0x70] sm:$0xff]
    %v1804 = vld [vmem:[%s3 + $0x78] sm:$0xff]
    %v1805 = vld [vmem:[%s3 + $0x80] sm:$0xff]
    %v1806 = vld [vmem:[%s3 + $0x88] sm:$0xff]
    %v1807 = vld [vmem:[%s3 + $0x90] sm:$0xff]
    %v1808 = vld [vmem:[%s3 + $0x98] sm:$0xff]
    %v1809 = vld [vmem:[%s3 + $0xa0] sm:$0xff]
    %v1810 = vld [vmem:[%s3 + $0xa8] sm:$0xff]
    %v1811 = vld [vmem:[%s3 + $0xb0] sm:$0xff]
    %v1812 = vld [vmem:[%s3 + $0xb8] sm:$0xff]
    %v1813 = vld [vmem:[%s3 + $0xc0] sm:$0xff]
    %v1814 = vld [vmem:[%s3 + $0xc8] sm:$0xff]
    %v1815 = vld [vmem:[%s3 + $0xd0] sm:$0xff]
    %v1816 = vld [vmem:[%s3 + $0xd8] sm:$0xff]
    %v1817 = vld [vmem:[%s3 + $0xe0] sm:$0xff]
    %v1818 = vld [vmem:[%s3 + $0xe8] sm:$0xff]
    %v1819 = vld [vmem:[%s3 + $0xf0] sm:$0xff]
    %v1820 = vld [vmem:[%s3 + $0xf8] sm:$0xff]
    %v1821 = vld [vmem:[%s3 + $0x100] sm:$0x1]
    %v1822 = vlaneseq
    %v1823 = vshrl.u32 %v1822, 7
    %v1824 = vsub.s32 0, %v1823
    %v1825 = vrot.slane %v1821, %v1824
    %1826 = vmatprep.subr.mxu0 0.0
    %1827 = vmatpush1.msra.mxu0 %v1789
    %1828 = vmatprep.subr.mxu0 0.0
    %1829 = vmatpush1.msra.mxu0 %v1790
    %1830 = vmatprep.subr.mxu0 0.0
    %1831 = vmatpush1.msra.mxu0 %v1791
    %1832 = vmatprep.subr.mxu0 0.0
    %1833 = vmatpush1.msra.mxu0 %v1792
    %1834 = vmatprep.subr.mxu0 0.0
    %1835 = vmatpush1.msra.mxu0 %v1793
    %1836 = vmatprep.subr.mxu0 0.0
    %1837 = vmatpush1.msra.mxu0 %v1794
    %1838 = vmatprep.subr.mxu0 0.0
    %1839 = vmatpush1.msra.mxu0 %v1795
    %1840 = vmatprep.subr.mxu0 0.0
    %1841 = vmatpush1.msra.mxu0 %v1796
    %1842 = vmatprep.subr.mxu0 0.0
    %1843 = vmatpush1.msra.mxu0 %v1797
    %1844 = vmatprep.subr.mxu0 0.0
    %1845 = vmatpush1.msra.mxu0 %v1798
    %1846 = vmatprep.subr.mxu0 0.0
    %1847 = vmatpush1.msra.mxu0 %v1799
    %1848 = vmatprep.subr.mxu0 0.0
    %1849 = vmatpush1.msra.mxu0 %v1800
    %1850 = vmatprep.subr.mxu0 0.0
    %1851 = vmatpush1.msra.mxu0 %v1801
    %1852 = vmatprep.subr.mxu0 0.0
    %1853 = vmatpush1.msra.mxu0 %v1802
    %1854 = vmatprep.subr.mxu0 0.0
    %1855 = vmatpush1.msra.mxu0 %v1803
    %1856 = vmatprep.subr.mxu0 0.0
    %1857 = vmatpush1.msra.mxu0 %v1804
    %1858 = vmatprep.subr.mxu0 0.0
    %1859 = vmatpush1.msra.mxu0 %v1805
    %1860 = vmatprep.subr.mxu0 0.0
    %1861 = vmatpush1.msra.mxu0 %v1806
    %1862 = vmatprep.subr.mxu0 0.0
    %1863 = vmatpush1.msra.mxu0 %v1807
    %1864 = vmatprep.subr.mxu0 0.0
    %1865 = vmatpush1.msra.mxu0 %v1808
    %1866 = vmatprep.subr.mxu0 0.0
    %1867 = vmatpush1.msra.mxu0 %v1809
    %1868 = vmatprep.subr.mxu0 0.0
    %1869 = vmatpush1.msra.mxu0 %v1810
    %1870 = vmatprep.subr.mxu0 0.0
    %1871 = vmatpush1.msra.mxu0 %v1811
    %1872 = vmatprep.subr.mxu0 0.0
    %1873 = vmatpush1.msra.mxu0 %v1812
    %1874 = vmatprep.subr.mxu0 0.0
    %1875 = vmatpush1.msra.mxu0 %v1813
    %1876 = vmatprep.subr.mxu0 0.0
    %1877 = vmatpush1.msra.mxu0 %v1814
    %1878 = vmatprep.subr.mxu0 0.0
    %1879 = vmatpush1.msra.mxu0 %v1815
    %1880 = vmatprep.subr.mxu0 0.0
    %1881 = vmatpush1.msra.mxu0 %v1816
    %1882 = vmatprep.subr.mxu0 0.0
    %1883 = vmatpush1.msra.mxu0 %v1817
    %1884 = vmatprep.subr.mxu0 0.0
    %1885 = vmatpush1.msra.mxu0 %v1818
    %1886 = vmatprep.subr.mxu0 0.0
    %1887 = vmatpush1.msra.mxu0 %v1819
    %1888 = vmatprep.subr.mxu0 0.0
    %1889 = vmatpush1.msra.mxu0 %v1820
    %1890 = vmatprep.mubr.f32.mxu0 %v1788
    %1891 = vmatmul.mubr.f32.gmra.mrb[0].mxu0 %v1787
    %v1892 = vpop.f32.mrb[0].mxu0
    %v1893 = vadd.f32 %v1825, %v1892
    %v1894 = vpop.f32.mrb[0].mxu0
    %1895 = vdwg.mxu0
    %v1896 = vmax.f32 %v1893, 0.0
    %v1897 = vld [vmem:[%s3 + $0x108] sm:$0xff]
    %v1898 = vld [vmem:[%s3 + $0x110] sm:$0xff]
    %v1899 = vld [vmem:[%s3 + $0x118] sm:$0xff]
    %v1900 = vld [vmem:[%s3 + $0x120] sm:$0xff]
    %v1901 = vld [vmem:[%s3 + $0x128] sm:$0xff]
    %v1902 = vld [vmem:[%s3 + $0x130] sm:$0xff]
    %v1903 = vld [vmem:[%s3 + $0x138] sm:$0xff]
    %v1904 = vld [vmem:[%s3 + $0x140] sm:$0xff]
    %v1905 = vld [vmem:[%s3 + $0x148] sm:$0x1]
    %v1906 = vlaneseq
    %v1907 = vshrl.u32 %v1906, 7
    %v1908 = vsub.s32 0, %v1907
    %v1909 = vrot.slane %v1905, %v1908
    %v1911 = vsel %vm924, %v1896, 0
    %1913 = vmatprep.subr.mxu0 0.0
    %1914 = vmatpush1.msra.mxu0 %v1897
    %1915 = vmatprep.subr.mxu0 0.0
    %1916 = vmatpush1.msra.mxu0 %v1898
    %1917 = vmatprep.subr.mxu0 0.0
    %1918 = vmatpush1.msra.mxu0 %v1899
    %1919 = vmatprep.subr.mxu0 0.0
    %1920 = vmatpush1.msra.mxu0 %v1900
    %1921 = vmatprep.subr.mxu0 0.0
    %1922 = vmatpush1.msra.mxu0 %v1901
    %1923 = vmatprep.subr.mxu0 0.0
    %1924 = vmatpush1.msra.mxu0 %v1902
    %1925 = vmatprep.subr.mxu0 0.0
    %1926 = vmatpush1.msra.mxu0 %v1903
    %1927 = vmatprep.subr.mxu0 0.0
    %1928 = vmatpush1.msra.mxu0 %v1904
    %1929 = vmatprep.subr.mxu0 0.0
    %1930 = vmatpush1.msra.mxu0 0.0
    %1931 = vmatprep.subr.mxu0 0.0
    %1932 = vmatpush1.msra.mxu0 0.0
    %1933 = vmatprep.subr.mxu0 0.0
    %1934 = vmatpush1.msra.mxu0 0.0
    %1935 = vmatprep.subr.mxu0 0.0
    %1936 = vmatpush1.msra.mxu0 0.0
    %1937 = vmatprep.subr.mxu0 0.0
    %1938 = vmatpush1.msra.mxu0 0.0
    %1939 = vmatprep.subr.mxu0 0.0
    %1940 = vmatpush1.msra.mxu0 0.0
    %1941 = vmatprep.subr.mxu0 0.0
    %1942 = vmatpush1.msra.mxu0 0.0
    %1943 = vmatprep.subr.mxu0 0.0
    %1944 = vmatpush1.msra.mxu0 0.0
    %1945 = vmatprep.subr.mxu0 0.0
    %1946 = vmatpush1.msra.mxu0 0.0
    %1947 = vmatprep.subr.mxu0 0.0
    %1948 = vmatpush1.msra.mxu0 0.0
    %1949 = vmatprep.subr.mxu0 0.0
    %1950 = vmatpush1.msra.mxu0 0.0
    %1951 = vmatprep.subr.mxu0 0.0
    %1952 = vmatpush1.msra.mxu0 0.0
    %1953 = vmatprep.subr.mxu0 0.0
    %1954 = vmatpush1.msra.mxu0 0.0
    %1955 = vmatprep.subr.mxu0 0.0
    %1956 = vmatpush1.msra.mxu0 0.0
    %1957 = vmatprep.subr.mxu0 0.0
    %1958 = vmatpush1.msra.mxu0 0.0
    %1959 = vmatprep.subr.mxu0 0.0
    %1960 = vmatpush1.msra.mxu0 0.0
    %1961 = vmatprep.subr.mxu0 0.0
    %1962 = vmatpush1.msra.mxu0 0.0
    %1963 = vmatprep.subr.mxu0 0.0
    %1964 = vmatpush1.msra.mxu0 0.0
    %1965 = vmatprep.subr.mxu0 0.0
    %1966 = vmatpush1.msra.mxu0 0.0
    %1967 = vmatprep.subr.mxu0 0.0
    %1968 = vmatpush1.msra.mxu0 0.0
    %1969 = vmatprep.subr.mxu0 0.0
    %1970 = vmatpush1.msra.mxu0 0.0
    %1971 = vmatprep.subr.mxu0 0.0
    %1972 = vmatpush1.msra.mxu0 0.0
    %1973 = vmatprep.subr.mxu0 0.0
    %1974 = vmatpush1.msra.mxu0 0.0
    %1975 = vmatprep.subr.mxu0 0.0
    %1976 = vmatpush1.msra.mxu0 0.0
    %1977 = vmatprep.mubr.f32.mxu0 0.0
    %1978 = vmatmul.mubr.f32.gmra.mrb[0].mxu0 %v1911
    %v1979 = vpop.f32.mrb[0].mxu0
    %v1980 = vadd.f32 %v1909, %v1979
    %v1981 = vpop.f32.mrb[0].mxu0
    %1982 = vdwg.mxu0
    %vm1983 = vcmask 9216
    %1984 = vst.msk [vmem:[#allocation2] sm:$0x3] %vm1983, %v1980
    // Predicated region
    $region18: #{net_forward.1} parent=1 // pred_check
      _
    $region19: #{net_forward.1} parent=1 // pred_check_branch
      %1986 = sbr.rel (0) target = $region21
    $region20: #{net_forward.1} parent=1 // pred_region
      %s1988 = ssub.s32 32, 32
      %1989 = vsyncadd [#allocation3], %s1988
      %s1991 = sshll.u32 [#allocation2], 4
      %s1992 = int_to_ptr.vmem [resolvable:$true] %s1991
      %1994 = dma.vmem_to_hbm [thread:$0]  %s1992, 32, %s4, [#allocation3]
    $region21: #{net_forward.1} parent=1 // pred_fallthru
      _
    // Predicated region
    $region22: #{net_forward.1} parent=1 // pred_check
      _
    $region23: #{net_forward.1} parent=1 // pred_check_branch
      %1996 = sbr.rel (0) target = $region25
    $region24: #{net_forward.1} parent=1 // pred_region
      %1997 = dma.done [#allocation3], 32
    $region25: #{net_forward.1} parent=1 // pred_fallthru
      _
    %1998 = vsyncpa [#allocation3], 1

</llo_original>
